<compile_context>
chip_gen: v5e
topology: v5e:2x2
jax: 0.10.0
libtpu: 0.0.40
codegen_flags: <defaults>
</compile_context>

<pallas_src>
import functools
import math

import jax
import jax.numpy as jnp
import numpy as np
from jax import lax
from jax.experimental import pallas as pl
from jax.experimental.pallas import tpu as pltpu


# -----------------------------------------------------------------------------
# Kernel: one grid step == one batch element, full (S, D) slab in VMEM.
# -----------------------------------------------------------------------------
def _encoder_block_kernel(
    x_ref, mask_ref, ln_ref,
    wq_ref, bq_ref, wk_ref, bk_ref, wv_ref, bv_ref, wo_ref, bo_ref,
    w1_ref, b1_ref, w2_ref, b2_ref,
    o_ref,
    *, nheads: int, eps: float,
):
    x = x_ref[0]                         # (S, D)
    S, D = x.shape
    d_k = D // nheads
    scale = 1.0 / math.sqrt(d_k)

    mask = mask_ref[0, 0, :, :]          # (S, S), 0 -> masked out

    g1 = ln_ref[0]
    bb1 = ln_ref[1]
    g2 = ln_ref[2]
    bb2 = ln_ref[3]

    def layer_norm(h, gain, bias):
        # torch: (x - mean) / (std + eps) * gain + bias,  std unbiased (ddof=1)
        mean = jnp.mean(h, axis=-1, keepdims=True)
        var = jnp.sum((h - mean) ** 2, axis=-1, keepdims=True) * (1.0 / (D - 1))
        std = jnp.sqrt(var)
        return (h - mean) / (std + eps) * gain + bias

    # ---- residual connection 1: pre-norm multi-head self-attention ----------
    h = layer_norm(x, g1, bb1)
    q = jnp.dot(h, wq_ref[...], preferred_element_type=jnp.float32) + bq_ref[...]
    k = jnp.dot(h, wk_ref[...], preferred_element_type=jnp.float32) + bk_ref[...]
    v = jnp.dot(h, wv_ref[...], preferred_element_type=jnp.float32) + bv_ref[...]

    head_outs = []
    for hh in range(nheads):             # nheads is a small static constant
        sl = slice(hh * d_k, (hh + 1) * d_k)
        q_h, k_h, v_h = q[:, sl], k[:, sl], v[:, sl]
        scores = lax.dot_general(        # q_h @ k_h.T without explicit transpose
            q_h, k_h, (((1,), (1,)), ((), ())),
            preferred_element_type=jnp.float32) * scale          # (S, S)
        scores = jnp.where(mask == 0, jnp.float32(-1e9), scores)
        scores = scores - jnp.max(scores, axis=-1, keepdims=True)
        p = jnp.exp(scores)
        p = p / jnp.sum(p, axis=-1, keepdims=True)               # softmax
        head_outs.append(jnp.dot(p, v_h, preferred_element_type=jnp.float32))

    attn = jnp.concatenate(head_outs, axis=-1)                   # (S, D)
    attn_out = jnp.dot(attn, wo_ref[...],
                       preferred_element_type=jnp.float32) + bo_ref[...]
    # TODO(synk): nn.Dropout implemented with eval-mode (identity) semantics;
    # training-mode masks would be host-generated and passed in as extra inputs.
    x1 = x + attn_out

    # ---- residual connection 2: pre-norm feed-forward ------------------------
    h2 = layer_norm(x1, g2, bb2)
    ff = jnp.dot(h2, w1_ref[...], preferred_element_type=jnp.float32) + b1_ref[...]
    ff = jnp.maximum(ff, 0.0)                                    # torch.relu
    ff = jnp.dot(ff, w2_ref[...], preferred_element_type=jnp.float32) + b2_ref[...]

    o_ref[0] = (x1 + ff).astype(o_ref.dtype)


# -----------------------------------------------------------------------------
# Wrapper
# -----------------------------------------------------------------------------
def encoder_block_forward(x, src_mask, params, *, nheads, eps=1e-6,
                          dropout_p=0.1, training=False):
    """x: (B, S, D) f32, src_mask: (B, 1, S, S) with 0 = masked."""
    del dropout_p, training   # eval-mode dropout == identity (see TODO in kernel)
    B, S, D = x.shape
    F = params["w1"].shape[1]

    ln = jnp.stack([params["ln1_gain"], params["ln1_bias"],
                    params["ln2_gain"], params["ln2_bias"]]).astype(jnp.float32)

    kernel = functools.partial(_encoder_block_kernel, nheads=nheads, eps=float(eps))

    def rep(shape):  # replicated weight block: same block every grid step
        zeros = (0,) * len(shape)
        return pl.BlockSpec(shape, lambda b, _z=zeros: _z)

    grid_spec = pltpu.PrefetchScalarGridSpec(
        num_scalar_prefetch=0,
        grid=(B,),
        in_specs=[
            pl.BlockSpec((1, S, D), lambda b: (b, 0, 0)),          # x
            pl.BlockSpec((1, 1, S, S), lambda b: (b, 0, 0, 0)),    # src_mask
            pl.BlockSpec(memory_space=pltpu.MemorySpace.SMEM),     # LN scalars
            rep((D, D)), rep((1, D)),                              # w_q, b_q
            rep((D, D)), rep((1, D)),                              # w_k, b_k
            rep((D, D)), rep((1, D)),                              # w_v, b_v
            rep((D, D)), rep((1, D)),                              # w_o, b_o
            rep((D, F)), rep((1, F)),                              # w_1, b_1
            rep((F, D)), rep((1, D)),                              # w_2, b_2
        ],
        out_specs=pl.BlockSpec((1, S, D), lambda b: (b, 0, 0)),
    )

    return pl.pallas_call(
        kernel,
        out_shape=jax.ShapeDtypeStruct((B, S, D), x.dtype),
        grid_spec=grid_spec,
        compiler_params=pltpu.CompilerParams(
            # batch rows are independent -> let megacore shard them
            dimension_semantics=("parallel",),
        ),
    )(x, src_mask, ln,
      params["wq"], params["bq"], params["wk"], params["bk"],
      params["wv"], params["bv"], params["wo"], params["bo"],
      params["w1"], params["b1"], params["w2"], params["b2"])


# -----------------------------------------------------------------------------
# Parameter init (weights stored as (in, out) == torch W.T) + pure-JAX reference
# -----------------------------------------------------------------------------
def init_encoder_block_params(key, d_model, d_ff):
    keys = jax.random.split(key, 7)

    def linear(k, d_in, d_out):
        kw, kb = jax.random.split(k)
        w = 0.1 * jax.random.normal(kw, (d_in, d_out), jnp.float32)
        b = 0.1 * jax.random.normal(kb, (1, d_out), jnp.float32)
        return w, b

    wq, bq = linear(keys[0], d_model, d_model)
    wk, bk = linear(keys[1], d_model, d_model)
    wv, bv = linear(keys[2], d_model, d_model)
    wo, bo = linear(keys[3], d_model, d_model)
    w1, b1 = linear(keys[4], d_model, d_ff)
    w2, b2 = linear(keys[5], d_ff, d_model)
    ln = 0.1 * jax.random.normal(keys[6], (4,), jnp.float32)
    return dict(
        wq=wq, bq=bq, wk=wk, bk=bk, wv=wv, bv=bv, wo=wo, bo=bo,
        w1=w1, b1=b1, w2=w2, b2=b2,
        ln1_gain=1.0 + ln[0], ln1_bias=ln[1],
        ln2_gain=1.0 + ln[2], ln2_bias=ln[3],
    )


def encoder_block_reference(x, src_mask, params, *, nheads, eps=1e-6):
    B, S, D = x.shape
    d_k = D // nheads
    scale = 1.0 / math.sqrt(d_k)

    def layer_norm(h, gain, bias):
        mean = jnp.mean(h, axis=-1, keepdims=True)
        std = jnp.std(h, axis=-1, keepdims=True, ddof=1)
        return (h - mean) / (std + eps) * gain + bias

    h = layer_norm(x, params["ln1_gain"], params["ln1_bias"])
    q = h @ params["wq"] + params["bq"]
    k = h @ params["wk"] + params["bk"]
    v = h @ params["wv"] + params["bv"]
    q = q.reshape(B, S, nheads, d_k).transpose(0, 2, 1, 3)
    k = k.reshape(B, S, nheads, d_k).transpose(0, 2, 1, 3)
    v = v.reshape(B, S, nheads, d_k).transpose(0, 2, 1, 3)
    scores = (q @ jnp.swapaxes(k, -1, -2)) * scale
    scores = jnp.where(src_mask == 0, -1e9, scores)
    attn = jax.nn.softmax(scores, axis=-1)
    ctx = (attn @ v).transpose(0, 2, 1, 3).reshape(B, S, D)
    x1 = x + (ctx @ params["wo"] + params["bo"])
    h2 = layer_norm(x1, params["ln2_gain"], params["ln2_bias"])
    ff = jnp.maximum(h2 @ params["w1"] + params["b1"], 0.0) @ params["w2"] + params["b2"]
    return x1 + ff


# -----------------------------------------------------------------------------
# Demo / self-check
# -----------------------------------------------------------------------------
if __name__ == "__main__":
    B, S, D, H, F = 2, 8, 32, 4, 64     # batch, seq, d_model, nheads, d_ff

    key = jax.random.PRNGKey(0)
    kx, kp = jax.random.split(key)
    x = jax.random.normal(kx, (B, S, D), dtype=jnp.float32)
    params = init_encoder_block_params(kp, D, F)

    # padding-style src_mask (B, 1, S, S): batch 0 sees all 8 keys, batch 1 only 6.
    valid = jnp.array([8, 6])
    col = jnp.arange(S)[None, None, None, :]
    src_mask = jnp.broadcast_to(col < valid[:, None, None, None],
                                (B, 1, S, S)).astype(jnp.float32)

    y = encoder_block_forward(x, src_mask, params, nheads=H)
    y = jax.block_until_ready(y)

    y_ref = encoder_block_reference(x, src_mask, params, nheads=H)
    np.testing.assert_allclose(np.asarray(y), np.asarray(y_ref),
                               rtol=1e-4, atol=1e-4)

    print("KERNEL_OK")
</pallas_src>

<mosaic_0001>
module attributes {stable_mosaic.version = 11 : i64} {
  func.func @_encoder_block_kernel(%arg0: i32, %arg1: memref<1x8x32xf32, #tpu.memory_space<vmem>>, %arg2: memref<1x1x8x8xf32, #tpu.memory_space<vmem>>, %arg3: memref<4xf32, #tpu.memory_space<smem>>, %arg4: memref<32x32xf32, #tpu.memory_space<vmem>>, %arg5: memref<1x32xf32, #tpu.memory_space<vmem>>, %arg6: memref<32x32xf32, #tpu.memory_space<vmem>>, %arg7: memref<1x32xf32, #tpu.memory_space<vmem>>, %arg8: memref<32x32xf32, #tpu.memory_space<vmem>>, %arg9: memref<1x32xf32, #tpu.memory_space<vmem>>, %arg10: memref<32x32xf32, #tpu.memory_space<vmem>>, %arg11: memref<1x32xf32, #tpu.memory_space<vmem>>, %arg12: memref<32x64xf32, #tpu.memory_space<vmem>>, %arg13: memref<1x64xf32, #tpu.memory_space<vmem>>, %arg14: memref<64x32xf32, #tpu.memory_space<vmem>>, %arg15: memref<1x32xf32, #tpu.memory_space<vmem>>, %arg16: memref<1x8x32xf32, #tpu.memory_space<vmem>>) attributes {dimension_semantics = [#tpu.dimension_semantics<parallel>], iteration_bounds = array<i64: 2>, scalar_prefetch = 0 : i64, scratch_operands = 0 : i64, tpu.core_type = #tpu.core_type<tc>, window_params = [{transform_indices = @transform_0, window_bounds = array<i64: 1, 8, 32>}, {transform_indices = @transform_1, window_bounds = array<i64: 1, 1, 8, 8>}, {transform_indices = @transform_2, window_bounds = array<i64: 4>}, {pipeline_mode = #tpu.pipeline_mode<synchronous>, transform_indices = @transform_3, window_bounds = array<i64: 32, 32>}, {pipeline_mode = #tpu.pipeline_mode<synchronous>, transform_indices = @transform_4, window_bounds = array<i64: 1, 32>}, {pipeline_mode = #tpu.pipeline_mode<synchronous>, transform_indices = @transform_5, window_bounds = array<i64: 32, 32>}, {pipeline_mode = #tpu.pipeline_mode<synchronous>, transform_indices = @transform_6, window_bounds = array<i64: 1, 32>}, {pipeline_mode = #tpu.pipeline_mode<synchronous>, transform_indices = @transform_7, window_bounds = array<i64: 32, 32>}, {pipeline_mode = #tpu.pipeline_mode<synchronous>, transform_indices = @transform_8, window_bounds = array<i64: 1, 32>}, {pipeline_mode = #tpu.pipeline_mode<synchronous>, transform_indices = @transform_9, window_bounds = array<i64: 32, 32>}, {pipeline_mode = #tpu.pipeline_mode<synchronous>, transform_indices = @transform_10, window_bounds = array<i64: 1, 32>}, {pipeline_mode = #tpu.pipeline_mode<synchronous>, transform_indices = @transform_11, window_bounds = array<i64: 32, 64>}, {pipeline_mode = #tpu.pipeline_mode<synchronous>, transform_indices = @transform_12, window_bounds = array<i64: 1, 64>}, {pipeline_mode = #tpu.pipeline_mode<synchronous>, transform_indices = @transform_13, window_bounds = array<i64: 64, 32>}, {pipeline_mode = #tpu.pipeline_mode<synchronous>, transform_indices = @transform_14, window_bounds = array<i64: 1, 32>}, {transform_indices = @transform_15, window_bounds = array<i64: 1, 8, 32>}]} {
    %c0 = arith.constant 0 : index
    %c0_0 = arith.constant 0 : index
    %c0_1 = arith.constant 0 : index
    %0 = vector.load %arg1[%c0, %c0_0, %c0_1] : memref<1x8x32xf32, #tpu.memory_space<vmem>>, vector<1x8x32xf32>
    %1 = vector.shape_cast %0 : vector<1x8x32xf32> to vector<8x32xf32>
    %c0_2 = arith.constant 0 : index
    %c0_3 = arith.constant 0 : index
    %c0_4 = arith.constant 0 : index
    %c0_5 = arith.constant 0 : index
    %2 = vector.load %arg2[%c0_2, %c0_3, %c0_4, %c0_5] : memref<1x1x8x8xf32, #tpu.memory_space<vmem>>, vector<1x1x8x8xf32>
    %3 = vector.shape_cast %2 : vector<1x1x8x8xf32> to vector<8x8xf32>
    %c0_6 = arith.constant 0 : index
    %4 = memref.load %arg3[%c0_6] : memref<4xf32, #tpu.memory_space<smem>>
    %c1 = arith.constant 1 : index
    %5 = memref.load %arg3[%c1] : memref<4xf32, #tpu.memory_space<smem>>
    %c2 = arith.constant 2 : index
    %6 = memref.load %arg3[%c2] : memref<4xf32, #tpu.memory_space<smem>>
    %c3 = arith.constant 3 : index
    %7 = memref.load %arg3[%c3] : memref<4xf32, #tpu.memory_space<smem>>
    %cst = arith.constant dense<0.000000e+00> : vector<8xf32>
    %8 = vector.multi_reduction <add>, %1, %cst [1] : vector<8x32xf32> to vector<8xf32>
    %9 = vector.shape_cast %8 : vector<8xf32> to vector<8x1xf32>
    %cst_7 = arith.constant 3.200000e+01 : f32
    %10 = vector.broadcast %cst_7 : f32 to vector<8x1xf32>
    %11 = arith.divf %9, %10 : vector<8x1xf32>
    %12 = vector.broadcast %11 : vector<8x1xf32> to vector<8x32xf32>
    %13 = arith.subf %1, %12 : vector<8x32xf32>
    %14 = arith.mulf %13, %13 : vector<8x32xf32>
    %cst_8 = arith.constant dense<0.000000e+00> : vector<8xf32>
    %15 = vector.multi_reduction <add>, %14, %cst_8 [1] : vector<8x32xf32> to vector<8xf32>
    %16 = vector.shape_cast %15 : vector<8xf32> to vector<8x1xf32>
    %cst_9 = arith.constant 0.0322580636 : f32
    %17 = vector.broadcast %cst_9 : f32 to vector<8x1xf32>
    %18 = arith.mulf %16, %17 : vector<8x1xf32>
    %19 = math.sqrt %18 : vector<8x1xf32>
    %20 = vector.broadcast %11 : vector<8x1xf32> to vector<8x32xf32>
    %21 = arith.subf %1, %20 : vector<8x32xf32>
    %cst_10 = arith.constant 9.99999997E-7 : f32
    %22 = vector.broadcast %cst_10 : f32 to vector<8x1xf32>
    %23 = arith.addf %19, %22 : vector<8x1xf32>
    %24 = vector.broadcast %23 : vector<8x1xf32> to vector<8x32xf32>
    %25 = arith.divf %21, %24 : vector<8x32xf32>
    %26 = vector.broadcast %4 : f32 to vector<8x32xf32>
    %27 = arith.mulf %25, %26 : vector<8x32xf32>
    %28 = vector.broadcast %5 : f32 to vector<8x32xf32>
    %29 = arith.addf %27, %28 : vector<8x32xf32>
    %c0_11 = arith.constant 0 : index
    %c0_12 = arith.constant 0 : index
    %30 = vector.load %arg4[%c0_11, %c0_12] : memref<32x32xf32, #tpu.memory_space<vmem>>, vector<32x32xf32>
    %cst_13 = arith.constant dense<0.000000e+00> : vector<8x32xf32>
    %31 = tpu.matmul %29, %30, %cst_13 {dimension_numbers = #tpu.dot_dimension_numbers<[1], [0], [0], [1], [0, 0, 1, 1], [], []>} : vector<8x32xf32>, vector<32x32xf32>, vector<8x32xf32> -> vector<8x32xf32>
    %c0_14 = arith.constant 0 : index
    %c0_15 = arith.constant 0 : index
    %32 = vector.load %arg5[%c0_14, %c0_15] : memref<1x32xf32, #tpu.memory_space<vmem>>, vector<1x32xf32>
    %33 = vector.broadcast %32 : vector<1x32xf32> to vector<8x32xf32>
    %34 = arith.addf %31, %33 : vector<8x32xf32>
    %c0_16 = arith.constant 0 : index
    %c0_17 = arith.constant 0 : index
    %35 = vector.load %arg6[%c0_16, %c0_17] : memref<32x32xf32, #tpu.memory_space<vmem>>, vector<32x32xf32>
    %cst_18 = arith.constant dense<0.000000e+00> : vector<8x32xf32>
    %36 = tpu.matmul %29, %35, %cst_18 {dimension_numbers = #tpu.dot_dimension_numbers<[1], [0], [0], [1], [0, 0, 1, 1], [], []>} : vector<8x32xf32>, vector<32x32xf32>, vector<8x32xf32> -> vector<8x32xf32>
    %c0_19 = arith.constant 0 : index
    %c0_20 = arith.constant 0 : index
    %37 = vector.load %arg7[%c0_19, %c0_20] : memref<1x32xf32, #tpu.memory_space<vmem>>, vector<1x32xf32>
    %38 = vector.broadcast %37 : vector<1x32xf32> to vector<8x32xf32>
    %39 = arith.addf %36, %38 : vector<8x32xf32>
    %c0_21 = arith.constant 0 : index
    %c0_22 = arith.constant 0 : index
    %40 = vector.load %arg8[%c0_21, %c0_22] : memref<32x32xf32, #tpu.memory_space<vmem>>, vector<32x32xf32>
    %cst_23 = arith.constant dense<0.000000e+00> : vector<8x32xf32>
    %41 = tpu.matmul %29, %40, %cst_23 {dimension_numbers = #tpu.dot_dimension_numbers<[1], [0], [0], [1], [0, 0, 1, 1], [], []>} : vector<8x32xf32>, vector<32x32xf32>, vector<8x32xf32> -> vector<8x32xf32>
    %c0_24 = arith.constant 0 : index
    %c0_25 = arith.constant 0 : index
    %42 = vector.load %arg9[%c0_24, %c0_25] : memref<1x32xf32, #tpu.memory_space<vmem>>, vector<1x32xf32>
    %43 = vector.broadcast %42 : vector<1x32xf32> to vector<8x32xf32>
    %44 = arith.addf %41, %43 : vector<8x32xf32>
    %45 = vector.extract_strided_slice %34 {offsets = [0, 0], sizes = [8, 8], strides = [1, 1]} : vector<8x32xf32> to vector<8x8xf32>
    %46 = vector.extract_strided_slice %39 {offsets = [0, 0], sizes = [8, 8], strides = [1, 1]} : vector<8x32xf32> to vector<8x8xf32>
    %47 = vector.extract_strided_slice %44 {offsets = [0, 0], sizes = [8, 8], strides = [1, 1]} : vector<8x32xf32> to vector<8x8xf32>
    %cst_26 = arith.constant dense<0.000000e+00> : vector<8x8xf32>
    %48 = tpu.matmul %45, %46, %cst_26 {dimension_numbers = #tpu.dot_dimension_numbers<[1], [1], [0], [0], [0, 0, 1, 0], [], []>} : vector<8x8xf32>, vector<8x8xf32>, vector<8x8xf32> -> vector<8x8xf32>
    %cst_27 = arith.constant 0.353553385 : f32
    %49 = vector.broadcast %cst_27 : f32 to vector<8x8xf32>
    %50 = arith.mulf %48, %49 : vector<8x8xf32>
    %cst_28 = arith.constant 0.000000e+00 : f32
    %51 = vector.broadcast %cst_28 : f32 to vector<8x8xf32>
    %52 = arith.cmpf oeq, %3, %51 : vector<8x8xf32>
    %cst_29 = arith.constant -1.000000e+09 : f32
    %53 = vector.broadcast %cst_29 : f32 to vector<8x8xf32>
    %54 = arith.select %52, %53, %50 : vector<8x8xi1>, vector<8x8xf32>
    %cst_30 = arith.constant dense<0xFF800000> : vector<8xf32>
    %55 = vector.multi_reduction <maximumf>, %54, %cst_30 [1] : vector<8x8xf32> to vector<8xf32>
    %56 = vector.shape_cast %55 : vector<8xf32> to vector<8x1xf32>
    %57 = vector.broadcast %56 : vector<8x1xf32> to vector<8x8xf32>
    %58 = arith.subf %54, %57 : vector<8x8xf32>
    %59 = math.exp %58 : vector<8x8xf32>
    %cst_31 = arith.constant dense<0.000000e+00> : vector<8xf32>
    %60 = vector.multi_reduction <add>, %59, %cst_31 [1] : vector<8x8xf32> to vector<8xf32>
    %61 = vector.shape_cast %60 : vector<8xf32> to vector<8x1xf32>
    %62 = vector.broadcast %61 : vector<8x1xf32> to vector<8x8xf32>
    %63 = arith.divf %59, %62 : vector<8x8xf32>
    %cst_32 = arith.constant dense<0.000000e+00> : vector<8x8xf32>
    %64 = tpu.matmul %63, %47, %cst_32 {dimension_numbers = #tpu.dot_dimension_numbers<[1], [0], [0], [1], [0, 0, 1, 1], [], []>} : vector<8x8xf32>, vector<8x8xf32>, vector<8x8xf32> -> vector<8x8xf32>
    %65 = vector.extract_strided_slice %34 {offsets = [0, 8], sizes = [8, 8], strides = [1, 1]} : vector<8x32xf32> to vector<8x8xf32>
    %66 = vector.extract_strided_slice %39 {offsets = [0, 8], sizes = [8, 8], strides = [1, 1]} : vector<8x32xf32> to vector<8x8xf32>
    %67 = vector.extract_strided_slice %44 {offsets = [0, 8], sizes = [8, 8], strides = [1, 1]} : vector<8x32xf32> to vector<8x8xf32>
    %cst_33 = arith.constant dense<0.000000e+00> : vector<8x8xf32>
    %68 = tpu.matmul %65, %66, %cst_33 {dimension_numbers = #tpu.dot_dimension_numbers<[1], [1], [0], [0], [0, 0, 1, 0], [], []>} : vector<8x8xf32>, vector<8x8xf32>, vector<8x8xf32> -> vector<8x8xf32>
    %cst_34 = arith.constant 0.353553385 : f32
    %69 = vector.broadcast %cst_34 : f32 to vector<8x8xf32>
    %70 = arith.mulf %68, %69 : vector<8x8xf32>
    %cst_35 = arith.constant 0.000000e+00 : f32
    %71 = vector.broadcast %cst_35 : f32 to vector<8x8xf32>
    %72 = arith.cmpf oeq, %3, %71 : vector<8x8xf32>
    %cst_36 = arith.constant -1.000000e+09 : f32
    %73 = vector.broadcast %cst_36 : f32 to vector<8x8xf32>
    %74 = arith.select %72, %73, %70 : vector<8x8xi1>, vector<8x8xf32>
    %cst_37 = arith.constant dense<0xFF800000> : vector<8xf32>
    %75 = vector.multi_reduction <maximumf>, %74, %cst_37 [1] : vector<8x8xf32> to vector<8xf32>
    %76 = vector.shape_cast %75 : vector<8xf32> to vector<8x1xf32>
    %77 = vector.broadcast %76 : vector<8x1xf32> to vector<8x8xf32>
    %78 = arith.subf %74, %77 : vector<8x8xf32>
    %79 = math.exp %78 : vector<8x8xf32>
    %cst_38 = arith.constant dense<0.000000e+00> : vector<8xf32>
    %80 = vector.multi_reduction <add>, %79, %cst_38 [1] : vector<8x8xf32> to vector<8xf32>
    %81 = vector.shape_cast %80 : vector<8xf32> to vector<8x1xf32>
    %82 = vector.broadcast %81 : vector<8x1xf32> to vector<8x8xf32>
    %83 = arith.divf %79, %82 : vector<8x8xf32>
    %cst_39 = arith.constant dense<0.000000e+00> : vector<8x8xf32>
    %84 = tpu.matmul %83, %67, %cst_39 {dimension_numbers = #tpu.dot_dimension_numbers<[1], [0], [0], [1], [0, 0, 1, 1], [], []>} : vector<8x8xf32>, vector<8x8xf32>, vector<8x8xf32> -> vector<8x8xf32>
    %85 = vector.extract_strided_slice %34 {offsets = [0, 16], sizes = [8, 8], strides = [1, 1]} : vector<8x32xf32> to vector<8x8xf32>
    %86 = vector.extract_strided_slice %39 {offsets = [0, 16], sizes = [8, 8], strides = [1, 1]} : vector<8x32xf32> to vector<8x8xf32>
    %87 = vector.extract_strided_slice %44 {offsets = [0, 16], sizes = [8, 8], strides = [1, 1]} : vector<8x32xf32> to vector<8x8xf32>
    %cst_40 = arith.constant dense<0.000000e+00> : vector<8x8xf32>
    %88 = tpu.matmul %85, %86, %cst_40 {dimension_numbers = #tpu.dot_dimension_numbers<[1], [1], [0], [0], [0, 0, 1, 0], [], []>} : vector<8x8xf32>, vector<8x8xf32>, vector<8x8xf32> -> vector<8x8xf32>
    %cst_41 = arith.constant 0.353553385 : f32
    %89 = vector.broadcast %cst_41 : f32 to vector<8x8xf32>
    %90 = arith.mulf %88, %89 : vector<8x8xf32>
    %cst_42 = arith.constant 0.000000e+00 : f32
    %91 = vector.broadcast %cst_42 : f32 to vector<8x8xf32>
    %92 = arith.cmpf oeq, %3, %91 : vector<8x8xf32>
    %cst_43 = arith.constant -1.000000e+09 : f32
    %93 = vector.broadcast %cst_43 : f32 to vector<8x8xf32>
    %94 = arith.select %92, %93, %90 : vector<8x8xi1>, vector<8x8xf32>
    %cst_44 = arith.constant dense<0xFF800000> : vector<8xf32>
    %95 = vector.multi_reduction <maximumf>, %94, %cst_44 [1] : vector<8x8xf32> to vector<8xf32>
    %96 = vector.shape_cast %95 : vector<8xf32> to vector<8x1xf32>
    %97 = vector.broadcast %96 : vector<8x1xf32> to vector<8x8xf32>
    %98 = arith.subf %94, %97 : vector<8x8xf32>
    %99 = math.exp %98 : vector<8x8xf32>
    %cst_45 = arith.constant dense<0.000000e+00> : vector<8xf32>
    %100 = vector.multi_reduction <add>, %99, %cst_45 [1] : vector<8x8xf32> to vector<8xf32>
    %101 = vector.shape_cast %100 : vector<8xf32> to vector<8x1xf32>
    %102 = vector.broadcast %101 : vector<8x1xf32> to vector<8x8xf32>
    %103 = arith.divf %99, %102 : vector<8x8xf32>
    %cst_46 = arith.constant dense<0.000000e+00> : vector<8x8xf32>
    %104 = tpu.matmul %103, %87, %cst_46 {dimension_numbers = #tpu.dot_dimension_numbers<[1], [0], [0], [1], [0, 0, 1, 1], [], []>} : vector<8x8xf32>, vector<8x8xf32>, vector<8x8xf32> -> vector<8x8xf32>
    %105 = vector.extract_strided_slice %34 {offsets = [0, 24], sizes = [8, 8], strides = [1, 1]} : vector<8x32xf32> to vector<8x8xf32>
    %106 = vector.extract_strided_slice %39 {offsets = [0, 24], sizes = [8, 8], strides = [1, 1]} : vector<8x32xf32> to vector<8x8xf32>
    %107 = vector.extract_strided_slice %44 {offsets = [0, 24], sizes = [8, 8], strides = [1, 1]} : vector<8x32xf32> to vector<8x8xf32>
    %cst_47 = arith.constant dense<0.000000e+00> : vector<8x8xf32>
    %108 = tpu.matmul %105, %106, %cst_47 {dimension_numbers = #tpu.dot_dimension_numbers<[1], [1], [0], [0], [0, 0, 1, 0], [], []>} : vector<8x8xf32>, vector<8x8xf32>, vector<8x8xf32> -> vector<8x8xf32>
    %cst_48 = arith.constant 0.353553385 : f32
    %109 = vector.broadcast %cst_48 : f32 to vector<8x8xf32>
    %110 = arith.mulf %108, %109 : vector<8x8xf32>
    %cst_49 = arith.constant 0.000000e+00 : f32
    %111 = vector.broadcast %cst_49 : f32 to vector<8x8xf32>
    %112 = arith.cmpf oeq, %3, %111 : vector<8x8xf32>
    %cst_50 = arith.constant -1.000000e+09 : f32
    %113 = vector.broadcast %cst_50 : f32 to vector<8x8xf32>
    %114 = arith.select %112, %113, %110 : vector<8x8xi1>, vector<8x8xf32>
    %cst_51 = arith.constant dense<0xFF800000> : vector<8xf32>
    %115 = vector.multi_reduction <maximumf>, %114, %cst_51 [1] : vector<8x8xf32> to vector<8xf32>
    %116 = vector.shape_cast %115 : vector<8xf32> to vector<8x1xf32>
    %117 = vector.broadcast %116 : vector<8x1xf32> to vector<8x8xf32>
    %118 = arith.subf %114, %117 : vector<8x8xf32>
    %119 = math.exp %118 : vector<8x8xf32>
    %cst_52 = arith.constant dense<0.000000e+00> : vector<8xf32>
    %120 = vector.multi_reduction <add>, %119, %cst_52 [1] : vector<8x8xf32> to vector<8xf32>
    %121 = vector.shape_cast %120 : vector<8xf32> to vector<8x1xf32>
    %122 = vector.broadcast %121 : vector<8x1xf32> to vector<8x8xf32>
    %123 = arith.divf %119, %122 : vector<8x8xf32>
    %cst_53 = arith.constant dense<0.000000e+00> : vector<8x8xf32>
    %124 = tpu.matmul %123, %107, %cst_53 {dimension_numbers = #tpu.dot_dimension_numbers<[1], [0], [0], [1], [0, 0, 1, 1], [], []>} : vector<8x8xf32>, vector<8x8xf32>, vector<8x8xf32> -> vector<8x8xf32>
    %125 = tpu.concatenate %64, %84, %104, %124 in 1 : vector<8x8xf32>, vector<8x8xf32>, vector<8x8xf32>, vector<8x8xf32> -> vector<8x32xf32>
    %c0_54 = arith.constant 0 : index
    %c0_55 = arith.constant 0 : index
    %126 = vector.load %arg10[%c0_54, %c0_55] : memref<32x32xf32, #tpu.memory_space<vmem>>, vector<32x32xf32>
    %cst_56 = arith.constant dense<0.000000e+00> : vector<8x32xf32>
    %127 = tpu.matmul %125, %126, %cst_56 {dimension_numbers = #tpu.dot_dimension_numbers<[1], [0], [0], [1], [0, 0, 1, 1], [], []>} : vector<8x32xf32>, vector<32x32xf32>, vector<8x32xf32> -> vector<8x32xf32>
    %c0_57 = arith.constant 0 : index
    %c0_58 = arith.constant 0 : index
    %128 = vector.load %arg11[%c0_57, %c0_58] : memref<1x32xf32, #tpu.memory_space<vmem>>, vector<1x32xf32>
    %129 = vector.broadcast %128 : vector<1x32xf32> to vector<8x32xf32>
    %130 = arith.addf %127, %129 : vector<8x32xf32>
    %131 = arith.addf %1, %130 : vector<8x32xf32>
    %cst_59 = arith.constant dense<0.000000e+00> : vector<8xf32>
    %132 = vector.multi_reduction <add>, %131, %cst_59 [1] : vector<8x32xf32> to vector<8xf32>
    %133 = vector.shape_cast %132 : vector<8xf32> to vector<8x1xf32>
    %cst_60 = arith.constant 3.200000e+01 : f32
    %134 = vector.broadcast %cst_60 : f32 to vector<8x1xf32>
    %135 = arith.divf %133, %134 : vector<8x1xf32>
    %136 = vector.broadcast %135 : vector<8x1xf32> to vector<8x32xf32>
    %137 = arith.subf %131, %136 : vector<8x32xf32>
    %138 = arith.mulf %137, %137 : vector<8x32xf32>
    %cst_61 = arith.constant dense<0.000000e+00> : vector<8xf32>
    %139 = vector.multi_reduction <add>, %138, %cst_61 [1] : vector<8x32xf32> to vector<8xf32>
    %140 = vector.shape_cast %139 : vector<8xf32> to vector<8x1xf32>
    %cst_62 = arith.constant 0.0322580636 : f32
    %141 = vector.broadcast %cst_62 : f32 to vector<8x1xf32>
    %142 = arith.mulf %140, %141 : vector<8x1xf32>
    %143 = math.sqrt %142 : vector<8x1xf32>
    %144 = vector.broadcast %135 : vector<8x1xf32> to vector<8x32xf32>
    %145 = arith.subf %131, %144 : vector<8x32xf32>
    %cst_63 = arith.constant 9.99999997E-7 : f32
    %146 = vector.broadcast %cst_63 : f32 to vector<8x1xf32>
    %147 = arith.addf %143, %146 : vector<8x1xf32>
    %148 = vector.broadcast %147 : vector<8x1xf32> to vector<8x32xf32>
    %149 = arith.divf %145, %148 : vector<8x32xf32>
    %150 = vector.broadcast %6 : f32 to vector<8x32xf32>
    %151 = arith.mulf %149, %150 : vector<8x32xf32>
    %152 = vector.broadcast %7 : f32 to vector<8x32xf32>
    %153 = arith.addf %151, %152 : vector<8x32xf32>
    %c0_64 = arith.constant 0 : index
    %c0_65 = arith.constant 0 : index
    %154 = vector.load %arg12[%c0_64, %c0_65] : memref<32x64xf32, #tpu.memory_space<vmem>>, vector<32x64xf32>
    %cst_66 = arith.constant dense<0.000000e+00> : vector<8x64xf32>
    %155 = tpu.matmul %153, %154, %cst_66 {dimension_numbers = #tpu.dot_dimension_numbers<[1], [0], [0], [1], [0, 0, 1, 1], [], []>} : vector<8x32xf32>, vector<32x64xf32>, vector<8x64xf32> -> vector<8x64xf32>
    %c0_67 = arith.constant 0 : index
    %c0_68 = arith.constant 0 : index
    %156 = vector.load %arg13[%c0_67, %c0_68] : memref<1x64xf32, #tpu.memory_space<vmem>>, vector<1x64xf32>
    %157 = vector.broadcast %156 : vector<1x64xf32> to vector<8x64xf32>
    %158 = arith.addf %155, %157 : vector<8x64xf32>
    %cst_69 = arith.constant 0.000000e+00 : f32
    %159 = vector.broadcast %cst_69 : f32 to vector<8x64xf32>
    %160 = arith.maximumf %158, %159 : vector<8x64xf32>
    %c0_70 = arith.constant 0 : index
    %c0_71 = arith.constant 0 : index
    %161 = vector.load %arg14[%c0_70, %c0_71] : memref<64x32xf32, #tpu.memory_space<vmem>>, vector<64x32xf32>
    %cst_72 = arith.constant dense<0.000000e+00> : vector<8x32xf32>
    %162 = tpu.matmul %160, %161, %cst_72 {dimension_numbers = #tpu.dot_dimension_numbers<[1], [0], [0], [1], [0, 0, 1, 1], [], []>} : vector<8x64xf32>, vector<64x32xf32>, vector<8x32xf32> -> vector<8x32xf32>
    %c0_73 = arith.constant 0 : index
    %c0_74 = arith.constant 0 : index
    %163 = vector.load %arg15[%c0_73, %c0_74] : memref<1x32xf32, #tpu.memory_space<vmem>>, vector<1x32xf32>
    %164 = vector.broadcast %163 : vector<1x32xf32> to vector<8x32xf32>
    %165 = arith.addf %162, %164 : vector<8x32xf32>
    %166 = arith.addf %131, %165 : vector<8x32xf32>
    %c0_75 = arith.constant 0 : index
    %c0_76 = arith.constant 0 : index
    %c0_77 = arith.constant 0 : index
    %167 = vector.load %arg16[%c0_75, %c0_76, %c0_77] : memref<1x8x32xf32, #tpu.memory_space<vmem>>, vector<1x8x32xf32>
    %168 = vector.shape_cast %167 : vector<1x8x32xf32> to vector<8x32xf32>
    %169 = vector.shape_cast %166 : vector<8x32xf32> to vector<1x8x32xf32>
    tpu.vector_store %arg16[%c0_75, %c0_76, %c0_77], %169 {strides = array<i32>} : memref<1x8x32xf32, #tpu.memory_space<vmem>>, vector<1x8x32xf32>,
    return
  }
  func.func @transform_0(%arg0: i32) -> (i32, i32, i32) {
    %c0_i32 = arith.constant 0 : i32
    %c0_i32_0 = arith.constant 0 : i32
    %c0_i32_1 = arith.constant 0 : i32
    return %arg0, %c0_i32, %c0_i32_0 : i32, i32, i32
  }
  func.func @transform_1(%arg0: i32) -> (i32, i32, i32, i32) {
    %c0_i32 = arith.constant 0 : i32
    %c0_i32_0 = arith.constant 0 : i32
    %c0_i32_1 = arith.constant 0 : i32
    %c0_i32_2 = arith.constant 0 : i32
    return %arg0, %c0_i32, %c0_i32_0, %c0_i32_1 : i32, i32, i32, i32
  }
  func.func @transform_2(%arg0: i32) -> i32 {
    %c0_i32 = arith.constant 0 : i32
    %c0_i32_0 = arith.constant 0 : i32
    return %c0_i32 : i32
  }
  func.func @transform_3(%arg0: i32) -> (i32, i32) {
    %c0_i32 = arith.constant 0 : i32
    %c0_i32_0 = arith.constant 0 : i32
    %c0_i32_1 = arith.constant 0 : i32
    return %c0_i32, %c0_i32_0 : i32, i32
  }
  func.func @transform_4(%arg0: i32) -> (i32, i32) {
    %c0_i32 = arith.constant 0 : i32
    %c0_i32_0 = arith.constant 0 : i32
    %c0_i32_1 = arith.constant 0 : i32
    return %c0_i32, %c0_i32_0 : i32, i32
  }
  func.func @transform_5(%arg0: i32) -> (i32, i32) {
    %c0_i32 = arith.constant 0 : i32
    %c0_i32_0 = arith.constant 0 : i32
    %c0_i32_1 = arith.constant 0 : i32
    return %c0_i32, %c0_i32_0 : i32, i32
  }
  func.func @transform_6(%arg0: i32) -> (i32, i32) {
    %c0_i32 = arith.constant 0 : i32
    %c0_i32_0 = arith.constant 0 : i32
    %c0_i32_1 = arith.constant 0 : i32
    return %c0_i32, %c0_i32_0 : i32, i32
  }
  func.func @transform_7(%arg0: i32) -> (i32, i32) {
    %c0_i32 = arith.constant 0 : i32
    %c0_i32_0 = arith.constant 0 : i32
    %c0_i32_1 = arith.constant 0 : i32
    return %c0_i32, %c0_i32_0 : i32, i32
  }
  func.func @transform_8(%arg0: i32) -> (i32, i32) {
    %c0_i32 = arith.constant 0 : i32
    %c0_i32_0 = arith.constant 0 : i32
    %c0_i32_1 = arith.constant 0 : i32
    return %c0_i32, %c0_i32_0 : i32, i32
  }
  func.func @transform_9(%arg0: i32) -> (i32, i32) {
    %c0_i32 = arith.constant 0 : i32
    %c0_i32_0 = arith.constant 0 : i32
    %c0_i32_1 = arith.constant 0 : i32
    return %c0_i32, %c0_i32_0 : i32, i32
  }
  func.func @transform_10(%arg0: i32) -> (i32, i32) {
    %c0_i32 = arith.constant 0 : i32
    %c0_i32_0 = arith.constant 0 : i32
    %c0_i32_1 = arith.constant 0 : i32
    return %c0_i32, %c0_i32_0 : i32, i32
  }
  func.func @transform_11(%arg0: i32) -> (i32, i32) {
    %c0_i32 = arith.constant 0 : i32
    %c0_i32_0 = arith.constant 0 : i32
    %c0_i32_1 = arith.constant 0 : i32
    return %c0_i32, %c0_i32_0 : i32, i32
  }
  func.func @transform_12(%arg0: i32) -> (i32, i32) {
    %c0_i32 = arith.constant 0 : i32
    %c0_i32_0 = arith.constant 0 : i32
    %c0_i32_1 = arith.constant 0 : i32
    return %c0_i32, %c0_i32_0 : i32, i32
  }
  func.func @transform_13(%arg0: i32) -> (i32, i32) {
    %c0_i32 = arith.constant 0 : i32
    %c0_i32_0 = arith.constant 0 : i32
    %c0_i32_1 = arith.constant 0 : i32
    return %c0_i32, %c0_i32_0 : i32, i32
  }
  func.func @transform_14(%arg0: i32) -> (i32, i32) {
    %c0_i32 = arith.constant 0 : i32
    %c0_i32_0 = arith.constant 0 : i32
    %c0_i32_1 = arith.constant 0 : i32
    return %c0_i32, %c0_i32_0 : i32, i32
  }
  func.func @transform_15(%arg0: i32) -> (i32, i32, i32) {
    %c0_i32 = arith.constant 0 : i32
    %c0_i32_0 = arith.constant 0 : i32
    %c0_i32_1 = arith.constant 0 : i32
    return %arg0, %c0_i32, %c0_i32_0 : i32, i32, i32
  }
}

</mosaic_0001>

<llo_original>
// kernel: tpu_custom_call.1
$region0: #{tpu_custom_call.1}
  #allocation0 [shape = 'u32[]', space=smem, size = 0x4, offset = 0x4, fixed_abs, tag = 'smem constant byte address 0x4 - core index']
  #allocation1 [shape = 'u32[72,128]{1,0:T(1,128)}', space=vmem, size = 0x9000, scoped, tag = 'internal scratch']
  %s0 = inlined_call_operand.hbm [shape: f32[2,8,32], index: 0, kind: input, shape index: {}]
  %s1 = inlined_call_operand.hbm [shape: f32[2,1,8,8], index: 1, kind: input, shape index: {}]
  %s2 = inlined_call_operand.vmem [shape: f32[4], index: 2, kind: input, shape index: {}]
  %s3 = inlined_call_operand.vmem [shape: f32[32,32], index: 3, kind: input, shape index: {}]
  %s4 = inlined_call_operand.vmem [shape: f32[1,32], index: 4, kind: input, shape index: {}]
  %s5 = inlined_call_operand.vmem [shape: f32[32,32], index: 5, kind: input, shape index: {}]
  %s6 = inlined_call_operand.vmem [shape: f32[1,32], index: 6, kind: input, shape index: {}]
  %s7 = inlined_call_operand.vmem [shape: f32[32,32], index: 7, kind: input, shape index: {}]
  %s8 = inlined_call_operand.vmem [shape: f32[1,32], index: 8, kind: input, shape index: {}]
  %s9 = inlined_call_operand.hbm [shape: f32[32,32], index: 9, kind: input, shape index: {}]
  %s10 = inlined_call_operand.vmem [shape: f32[1,32], index: 10, kind: input, shape index: {}]
  %s11 = inlined_call_operand.hbm [shape: f32[32,64], index: 11, kind: input, shape index: {}]
  %s12 = inlined_call_operand.vmem [shape: f32[1,64], index: 12, kind: input, shape index: {}]
  %s13 = inlined_call_operand.vmem [shape: f32[64,32], index: 13, kind: input, shape index: {}]
  %s14 = inlined_call_operand.vmem [shape: f32[1,32], index: 14, kind: input, shape index: {}]
  %s15 = inlined_call_operand.hbm [shape: f32[2,8,32], index: 15, kind: output, shape index: {}]
  %s16 = sld [smem:[#allocation0]]
  $region113: #{tpu_custom_call.1} parent=0
    _
  %s18 = ssub.s32 1, %s16
  %s19 = scalar_select 0, %s18, %s16
  $region1: #{tpu_custom_call.1} parent=0
    #allocation2 [shape = 'u8[8192]{0}', space=vmem, size = 0x2000, scoped, tag = 'input window, operand 0']
    #allocation3 [shape = 's32[2]{0}', space=sflag, size = 0x8, scoped, tag = 'scoped memory for tpu_custom_call.1']
    #allocation4 [shape = 's32[2]{0}', space=sflag, size = 0x8, scoped, tag = 'scoped memory for tpu_custom_call.1']
    #allocation5 [shape = 's32[2]{0}', space=sflag, size = 0x8, scoped, tag = 'scoped memory for tpu_custom_call.1']
    #allocation6 [shape = 'u8[8192]{0}', space=vmem, size = 0x2000, scoped, tag = 'input window, operand 1']
    #allocation7 [shape = 's32[2]{0}', space=sflag, size = 0x8, scoped, tag = 'scoped memory for tpu_custom_call.1']
    #allocation8 [shape = 'u8[512]{0}', space=smem, size = 0x200, scoped, tag = 'input window, operand 2, single buffered']
    #allocation9 [shape = 'u8[16384]{0}', space=vmem, size = 0x4000, scoped, tag = 'input window, operand 9, single buffered']
    #allocation10 [shape = 'u8[16384]{0}', space=vmem, size = 0x4000, scoped, tag = 'input window, operand 11, single buffered']
    #allocation11 [shape = 's32[1]{0}', space=sflag, size = 0x4, scoped, tag = 'scoped memory for tpu_custom_call.1']
    #allocation12 [shape = 'u8[8192]{0}', space=vmem, size = 0x2000, scoped, tag = 'output window, operand 0']
    %20 = vsyncpa [#allocation3], 0
    %s21 = scalar_lea.sflag [#allocation3], 1
    %22 = vsyncpa %s21, 0
    %23 = vsyncpa [#allocation7], 0
    %s24 = scalar_lea.sflag [#allocation7], 1
    %25 = vsyncpa %s24, 0
    %26 = vsyncpa [#allocation5], 0
    %27 = vsyncpa [#allocation11], 0
    %28 = vsyncpa [#allocation4], 0
    %s29 = scalar_lea.sflag [#allocation4], 1
    %30 = vsyncpa %s29, 0
    loop: start=0, step=1, limit=4
    $region2: #{tpu_custom_call.1} parent=1 // loop_pre_header
      _
    $region3: #{tpu_custom_call.1} parent=1 // loop_header
      %s32 = sphi 0, %s36
      %p33 = scmp.ge.s32.totalorder %s32, 4
      %s42 = sphi 0, %s44
      %s45 = sphi 0, %s42
      %s46 = sphi 0, %s45
      %s62 = sphi 0, %s46
      %s68 = sphi 0, %s70
      %s71 = sphi 0, %s68
      %s72 = sphi 0, %s71
      %s88 = sphi 0, %s72
      %s92 = sphi 0, %s92
      %s94 = sphi 0, %s92
      %s95 = sphi 0, %s94
      %s109 = sphi 0, %s95
      %s113 = sphi 0, %s113
      %s115 = sphi 0, %s113
      %s116 = sphi 0, %s115
      %s130 = sphi 0, %s116
      %s134 = sphi 0, %s134
      %s136 = sphi 0, %s134
      %s137 = sphi 0, %s136
      %s151 = sphi 0, %s137
      %s155 = sphi 0, %s155
      %s157 = sphi 0, %s155
      %s158 = sphi 0, %s157
      %s172 = sphi 0, %s158
      %s176 = sphi 0, %s176
      %s178 = sphi 0, %s176
      %s179 = sphi 0, %s178
      %s193 = sphi 0, %s179
      %s197 = sphi 0, %s197
      %s199 = sphi 0, %s197
      %s200 = sphi 0, %s199
      %s214 = sphi 0, %s200
      %s218 = sphi 0, %s218
      %s220 = sphi 0, %s218
      %s221 = sphi 0, %s220
      %s235 = sphi 0, %s221
      %s239 = sphi 0, %s239
      %s241 = sphi 0, %s239
      %s242 = sphi 0, %s241
      %s256 = sphi 0, %s242
      %s260 = sphi 0, %s260
      %s262 = sphi 0, %s260
      %s263 = sphi 0, %s262
      %s277 = sphi 0, %s263
      %s281 = sphi 0, %s281
      %s283 = sphi 0, %s281
      %s284 = sphi 0, %s283
      %s298 = sphi 0, %s284
      %s302 = sphi 0, %s302
      %s304 = sphi 0, %s302
      %s305 = sphi 0, %s304
      %s319 = sphi 0, %s305
      %s323 = sphi 0, %s323
      %s325 = sphi 0, %s323
      %s326 = sphi 0, %s325
      %s340 = sphi 0, %s326
      %s344 = sphi 0, %s344
      %s346 = sphi 0, %s344
      %s347 = sphi 0, %s346
      %s361 = sphi 0, %s347
      %s367 = sphi 0, %s369
      %s370 = sphi 0, %s367
      %s371 = sphi 0, %s370
      %s387 = sphi 0, %s371
    $region4: #{tpu_custom_call.1} parent=1 // loop_header_branch
      %35 = sbr.rel (%p33) target = $region8
    $region5: #{tpu_custom_call.1} parent=1 // loop_body
      %s37 = ssub.s32 %s32, 1
      %s38 = ssub.s32 %s32, 2
      %s39 = sadd.s32 %s32, 1
      %s40 = ssub.s32 %s32, %s39
      %p41 = scmp.eq.s32.totalorder %s40, 0
      %s43 = sadd.s32 %s42, 1
      %s44 = scalar_select %p41, %s42, %s43
      %p47 = pneg %p41
      %p48 = scmp.eq.s32.totalorder %s32, 1
      %p49 = por %p47, %p48
      %p50 = scmp.ne.s32.totalorder %s42, %s45
      %p51 = scmp.eq.s32.totalorder %s32, 0
      %p52 = por %p50, %p51
      %p53 = scmp.ne.s32.totalorder %s42, %s45
      %p54 = scmp.eq.s32.totalorder %s37, 1
      %p55 = por %p53, %p54
      %p56 = scmp.ne.s32.totalorder %s45, %s46
      %p57 = scmp.eq.s32.totalorder %s37, 0
      %p58 = por %p56, %p57
      %p59 = scmp.ne.s32.totalorder %s45, %s46
      %p60 = scmp.eq.s32.totalorder %s38, 1
      %p61 = por %p59, %p60
      %p63 = scmp.ne.s32.totalorder %s46, %s62
      %p64 = scmp.eq.s32.totalorder %s38, 0
      %p65 = por %p63, %p64
      %s66 = ssub.s32 %s32, %s39
      %p67 = scmp.eq.s32.totalorder %s66, 0
      %s69 = sadd.s32 %s68, 1
      %s70 = scalar_select %p67, %s68, %s69
      %p73 = pneg %p67
      %p74 = scmp.eq.s32.totalorder %s32, 1
      %p75 = por %p73, %p74
      %p76 = scmp.ne.s32.totalorder %s68, %s71
      %p77 = scmp.eq.s32.totalorder %s32, 0
      %p78 = por %p76, %p77
      %p79 = scmp.ne.s32.totalorder %s68, %s71
      %p80 = scmp.eq.s32.totalorder %s37, 1
      %p81 = por %p79, %p80
      %p82 = scmp.ne.s32.totalorder %s71, %s72
      %p83 = scmp.eq.s32.totalorder %s37, 0
      %p84 = por %p82, %p83
      %p85 = scmp.ne.s32.totalorder %s71, %s72
      %p86 = scmp.eq.s32.totalorder %s38, 1
      %p87 = por %p85, %p86
      %p89 = scmp.ne.s32.totalorder %s72, %s88
      %p90 = scmp.eq.s32.totalorder %s38, 0
      %p91 = por %p89, %p90
      %s93 = sadd.s32 %s92, 1
      %p96 = scmp.eq.s32.totalorder %s32, 1
      %p97 = scmp.ne.s32.totalorder %s92, %s94
      %p98 = scmp.eq.s32.totalorder %s32, 0
      %p99 = por %p97, %p98
      %p100 = scmp.ne.s32.totalorder %s92, %s94
      %p101 = scmp.eq.s32.totalorder %s37, 1
      %p102 = por %p100, %p101
      %p103 = scmp.ne.s32.totalorder %s94, %s95
      %p104 = scmp.eq.s32.totalorder %s37, 0
      %p105 = por %p103, %p104
      %p106 = scmp.ne.s32.totalorder %s94, %s95
      %p107 = scmp.eq.s32.totalorder %s38, 1
      %p108 = por %p106, %p107
      %p110 = scmp.ne.s32.totalorder %s95, %s109
      %p111 = scmp.eq.s32.totalorder %s38, 0
      %p112 = por %p110, %p111
      %s114 = sadd.s32 %s113, 1
      %p117 = scmp.eq.s32.totalorder %s32, 1
      %p118 = scmp.ne.s32.totalorder %s113, %s115
      %p119 = scmp.eq.s32.totalorder %s32, 0
      %p120 = por %p118, %p119
      %p121 = scmp.ne.s32.totalorder %s113, %s115
      %p122 = scmp.eq.s32.totalorder %s37, 1
      %p123 = por %p121, %p122
      %p124 = scmp.ne.s32.totalorder %s115, %s116
      %p125 = scmp.eq.s32.totalorder %s37, 0
      %p126 = por %p124, %p125
      %p127 = scmp.ne.s32.totalorder %s115, %s116
      %p128 = scmp.eq.s32.totalorder %s38, 1
      %p129 = por %p127, %p128
      %p131 = scmp.ne.s32.totalorder %s116, %s130
      %p132 = scmp.eq.s32.totalorder %s38, 0
      %p133 = por %p131, %p132
      %s135 = sadd.s32 %s134, 1
      %p138 = scmp.eq.s32.totalorder %s32, 1
      %p139 = scmp.ne.s32.totalorder %s134, %s136
      %p140 = scmp.eq.s32.totalorder %s32, 0
      %p141 = por %p139, %p140
      %p142 = scmp.ne.s32.totalorder %s134, %s136
      %p143 = scmp.eq.s32.totalorder %s37, 1
      %p144 = por %p142, %p143
      %p145 = scmp.ne.s32.totalorder %s136, %s137
      %p146 = scmp.eq.s32.totalorder %s37, 0
      %p147 = por %p145, %p146
      %p148 = scmp.ne.s32.totalorder %s136, %s137
      %p149 = scmp.eq.s32.totalorder %s38, 1
      %p150 = por %p148, %p149
      %p152 = scmp.ne.s32.totalorder %s137, %s151
      %p153 = scmp.eq.s32.totalorder %s38, 0
      %p154 = por %p152, %p153
      %s156 = sadd.s32 %s155, 1
      %p159 = scmp.eq.s32.totalorder %s32, 1
      %p160 = scmp.ne.s32.totalorder %s155, %s157
      %p161 = scmp.eq.s32.totalorder %s32, 0
      %p162 = por %p160, %p161
      %p163 = scmp.ne.s32.totalorder %s155, %s157
      %p164 = scmp.eq.s32.totalorder %s37, 1
      %p165 = por %p163, %p164
      %p166 = scmp.ne.s32.totalorder %s157, %s158
      %p167 = scmp.eq.s32.totalorder %s37, 0
      %p168 = por %p166, %p167
      %p169 = scmp.ne.s32.totalorder %s157, %s158
      %p170 = scmp.eq.s32.totalorder %s38, 1
      %p171 = por %p169, %p170
      %p173 = scmp.ne.s32.totalorder %s158, %s172
      %p174 = scmp.eq.s32.totalorder %s38, 0
      %p175 = por %p173, %p174
      %s177 = sadd.s32 %s176, 1
      %p180 = scmp.eq.s32.totalorder %s32, 1
      %p181 = scmp.ne.s32.totalorder %s176, %s178
      %p182 = scmp.eq.s32.totalorder %s32, 0
      %p183 = por %p181, %p182
      %p184 = scmp.ne.s32.totalorder %s176, %s178
      %p185 = scmp.eq.s32.totalorder %s37, 1
      %p186 = por %p184, %p185
      %p187 = scmp.ne.s32.totalorder %s178, %s179
      %p188 = scmp.eq.s32.totalorder %s37, 0
      %p189 = por %p187, %p188
      %p190 = scmp.ne.s32.totalorder %s178, %s179
      %p191 = scmp.eq.s32.totalorder %s38, 1
      %p192 = por %p190, %p191
      %p194 = scmp.ne.s32.totalorder %s179, %s193
      %p195 = scmp.eq.s32.totalorder %s38, 0
      %p196 = por %p194, %p195
      %s198 = sadd.s32 %s197, 1
      %p201 = scmp.eq.s32.totalorder %s32, 1
      %p202 = scmp.ne.s32.totalorder %s197, %s199
      %p203 = scmp.eq.s32.totalorder %s32, 0
      %p204 = por %p202, %p203
      %p205 = scmp.ne.s32.totalorder %s197, %s199
      %p206 = scmp.eq.s32.totalorder %s37, 1
      %p207 = por %p205, %p206
      %p208 = scmp.ne.s32.totalorder %s199, %s200
      %p209 = scmp.eq.s32.totalorder %s37, 0
      %p210 = por %p208, %p209
      %p211 = scmp.ne.s32.totalorder %s199, %s200
      %p212 = scmp.eq.s32.totalorder %s38, 1
      %p213 = por %p211, %p212
      %p215 = scmp.ne.s32.totalorder %s200, %s214
      %p216 = scmp.eq.s32.totalorder %s38, 0
      %p217 = por %p215, %p216
      %s219 = sadd.s32 %s218, 1
      %p222 = scmp.eq.s32.totalorder %s32, 1
      %p223 = scmp.ne.s32.totalorder %s218, %s220
      %p224 = scmp.eq.s32.totalorder %s32, 0
      %p225 = por %p223, %p224
      %p226 = scmp.ne.s32.totalorder %s218, %s220
      %p227 = scmp.eq.s32.totalorder %s37, 1
      %p228 = por %p226, %p227
      %p229 = scmp.ne.s32.totalorder %s220, %s221
      %p230 = scmp.eq.s32.totalorder %s37, 0
      %p231 = por %p229, %p230
      %p232 = scmp.ne.s32.totalorder %s220, %s221
      %p233 = scmp.eq.s32.totalorder %s38, 1
      %p234 = por %p232, %p233
      %p236 = scmp.ne.s32.totalorder %s221, %s235
      %p237 = scmp.eq.s32.totalorder %s38, 0
      %p238 = por %p236, %p237
      %s240 = sadd.s32 %s239, 1
      %p243 = scmp.eq.s32.totalorder %s32, 1
      %p244 = scmp.ne.s32.totalorder %s239, %s241
      %p245 = scmp.eq.s32.totalorder %s32, 0
      %p246 = por %p244, %p245
      %p247 = scmp.ne.s32.totalorder %s239, %s241
      %p248 = scmp.eq.s32.totalorder %s37, 1
      %p249 = por %p247, %p248
      %p250 = scmp.ne.s32.totalorder %s241, %s242
      %p251 = scmp.eq.s32.totalorder %s37, 0
      %p252 = por %p250, %p251
      %p253 = scmp.ne.s32.totalorder %s241, %s242
      %p254 = scmp.eq.s32.totalorder %s38, 1
      %p255 = por %p253, %p254
      %p257 = scmp.ne.s32.totalorder %s242, %s256
      %p258 = scmp.eq.s32.totalorder %s38, 0
      %p259 = por %p257, %p258
      %s261 = sadd.s32 %s260, 1
      %p264 = scmp.eq.s32.totalorder %s32, 1
      %p265 = scmp.ne.s32.totalorder %s260, %s262
      %p266 = scmp.eq.s32.totalorder %s32, 0
      %p267 = por %p265, %p266
      %p268 = scmp.ne.s32.totalorder %s260, %s262
      %p269 = scmp.eq.s32.totalorder %s37, 1
      %p270 = por %p268, %p269
      %p271 = scmp.ne.s32.totalorder %s262, %s263
      %p272 = scmp.eq.s32.totalorder %s37, 0
      %p273 = por %p271, %p272
      %p274 = scmp.ne.s32.totalorder %s262, %s263
      %p275 = scmp.eq.s32.totalorder %s38, 1
      %p276 = por %p274, %p275
      %p278 = scmp.ne.s32.totalorder %s263, %s277
      %p279 = scmp.eq.s32.totalorder %s38, 0
      %p280 = por %p278, %p279
      %s282 = sadd.s32 %s281, 1
      %p285 = scmp.eq.s32.totalorder %s32, 1
      %p286 = scmp.ne.s32.totalorder %s281, %s283
      %p287 = scmp.eq.s32.totalorder %s32, 0
      %p288 = por %p286, %p287
      %p289 = scmp.ne.s32.totalorder %s281, %s283
      %p290 = scmp.eq.s32.totalorder %s37, 1
      %p291 = por %p289, %p290
      %p292 = scmp.ne.s32.totalorder %s283, %s284
      %p293 = scmp.eq.s32.totalorder %s37, 0
      %p294 = por %p292, %p293
      %p295 = scmp.ne.s32.totalorder %s283, %s284
      %p296 = scmp.eq.s32.totalorder %s38, 1
      %p297 = por %p295, %p296
      %p299 = scmp.ne.s32.totalorder %s284, %s298
      %p300 = scmp.eq.s32.totalorder %s38, 0
      %p301 = por %p299, %p300
      %s303 = sadd.s32 %s302, 1
      %p306 = scmp.eq.s32.totalorder %s32, 1
      %p307 = scmp.ne.s32.totalorder %s302, %s304
      %p308 = scmp.eq.s32.totalorder %s32, 0
      %p309 = por %p307, %p308
      %p310 = scmp.ne.s32.totalorder %s302, %s304
      %p311 = scmp.eq.s32.totalorder %s37, 1
      %p312 = por %p310, %p311
      %p313 = scmp.ne.s32.totalorder %s304, %s305
      %p314 = scmp.eq.s32.totalorder %s37, 0
      %p315 = por %p313, %p314
      %p316 = scmp.ne.s32.totalorder %s304, %s305
      %p317 = scmp.eq.s32.totalorder %s38, 1
      %p318 = por %p316, %p317
      %p320 = scmp.ne.s32.totalorder %s305, %s319
      %p321 = scmp.eq.s32.totalorder %s38, 0
      %p322 = por %p320, %p321
      %s324 = sadd.s32 %s323, 1
      %p327 = scmp.eq.s32.totalorder %s32, 1
      %p328 = scmp.ne.s32.totalorder %s323, %s325
      %p329 = scmp.eq.s32.totalorder %s32, 0
      %p330 = por %p328, %p329
      %p331 = scmp.ne.s32.totalorder %s323, %s325
      %p332 = scmp.eq.s32.totalorder %s37, 1
      %p333 = por %p331, %p332
      %p334 = scmp.ne.s32.totalorder %s325, %s326
      %p335 = scmp.eq.s32.totalorder %s37, 0
      %p336 = por %p334, %p335
      %p337 = scmp.ne.s32.totalorder %s325, %s326
      %p338 = scmp.eq.s32.totalorder %s38, 1
      %p339 = por %p337, %p338
      %p341 = scmp.ne.s32.totalorder %s326, %s340
      %p342 = scmp.eq.s32.totalorder %s38, 0
      %p343 = por %p341, %p342
      %s345 = sadd.s32 %s344, 1
      %p348 = scmp.eq.s32.totalorder %s32, 1
      %p349 = scmp.ne.s32.totalorder %s344, %s346
      %p350 = scmp.eq.s32.totalorder %s32, 0
      %p351 = por %p349, %p350
      %p352 = scmp.ne.s32.totalorder %s344, %s346
      %p353 = scmp.eq.s32.totalorder %s37, 1
      %p354 = por %p352, %p353
      %p355 = scmp.ne.s32.totalorder %s346, %s347
      %p356 = scmp.eq.s32.totalorder %s37, 0
      %p357 = por %p355, %p356
      %p358 = scmp.ne.s32.totalorder %s346, %s347
      %p359 = scmp.eq.s32.totalorder %s38, 1
      %p360 = por %p358, %p359
      %p362 = scmp.ne.s32.totalorder %s347, %s361
      %p363 = scmp.eq.s32.totalorder %s38, 0
      %p364 = por %p362, %p363
      %s365 = ssub.s32 %s32, %s39
      %p366 = scmp.eq.s32.totalorder %s365, 0
      %s368 = sadd.s32 %s367, 1
      %s369 = scalar_select %p366, %s367, %s368
      %p372 = pneg %p366
      %p373 = scmp.eq.s32.totalorder %s32, 1
      %p374 = por %p372, %p373
      %p375 = scmp.ne.s32.totalorder %s367, %s370
      %p376 = scmp.eq.s32.totalorder %s32, 0
      %p377 = por %p375, %p376
      %p378 = scmp.ne.s32.totalorder %s367, %s370
      %p379 = scmp.eq.s32.totalorder %s37, 1
      %p380 = por %p378, %p379
      %p381 = scmp.ne.s32.totalorder %s370, %s371
      %p382 = scmp.eq.s32.totalorder %s37, 0
      %p383 = por %p381, %p382
      %p384 = scmp.ne.s32.totalorder %s370, %s371
      %p385 = scmp.eq.s32.totalorder %s38, 1
      %p386 = por %p384, %p385
      %p388 = scmp.ne.s32.totalorder %s371, %s387
      %p389 = scmp.eq.s32.totalorder %s38, 0
      %p390 = por %p388, %p389
      %p391 = scmp.le.s32.totalorder 1, %s32
      %p392 = scmp.lt.s32.totalorder %s32, 3
      %p393 = pnand %p391, %p392
      %p394 = pneg %p393
      // Predicated region
      $region9: #{tpu_custom_call.1} parent=5 // pred_check
        _
      $region10: #{tpu_custom_call.1} parent=5 // pred_check_branch
        %396 = sbr.rel (%p393) target = $region12
      $region11: #{tpu_custom_call.1} parent=5 // pred_region
        %s397 = ssub.s32 %s32, 1
        // Predicated region
        $region13: #{tpu_custom_call.1} parent=11 // pred_check
          %p398 = pneg %p105
        $region14: #{tpu_custom_call.1} parent=11 // pred_check_branch
          %400 = sbr.rel (%p398) target = $region16
        $region15: #{tpu_custom_call.1} parent=11 // pred_region
          %402 = vsyncadd [#allocation5], 0
          %s404 = sshll.u32 %s2, 4
          %s405 = int_to_ptr.vmem [resolvable:$true] %s404
          %407 = dma.vmem_to_smem %s405, 16, [#allocation8], [#allocation5]
        $region16: #{tpu_custom_call.1} parent=11 // pred_fallthru
          _
        // Predicated region
        $region17: #{tpu_custom_call.1} parent=11 // pred_check
          %p408 = pneg %p126
        $region18: #{tpu_custom_call.1} parent=11 // pred_check_branch
          %410 = sbr.rel (%p408) target = $region20
        $region19: #{tpu_custom_call.1} parent=11 // pred_region
          _
        $region20: #{tpu_custom_call.1} parent=11 // pred_fallthru
          _
        // Predicated region
        $region21: #{tpu_custom_call.1} parent=11 // pred_check
          %p411 = pneg %p147
        $region22: #{tpu_custom_call.1} parent=11 // pred_check_branch
          %413 = sbr.rel (%p411) target = $region24
        $region23: #{tpu_custom_call.1} parent=11 // pred_region
          _
        $region24: #{tpu_custom_call.1} parent=11 // pred_fallthru
          _
        // Predicated region
        $region25: #{tpu_custom_call.1} parent=11 // pred_check
          %p414 = pneg %p168
        $region26: #{tpu_custom_call.1} parent=11 // pred_check_branch
          %416 = sbr.rel (%p414) target = $region28
        $region27: #{tpu_custom_call.1} parent=11 // pred_region
          _
        $region28: #{tpu_custom_call.1} parent=11 // pred_fallthru
          _
        // Predicated region
        $region29: #{tpu_custom_call.1} parent=11 // pred_check
          %p417 = pneg %p189
        $region30: #{tpu_custom_call.1} parent=11 // pred_check_branch
          %419 = sbr.rel (%p417) target = $region32
        $region31: #{tpu_custom_call.1} parent=11 // pred_region
          _
        $region32: #{tpu_custom_call.1} parent=11 // pred_fallthru
          _
        // Predicated region
        $region33: #{tpu_custom_call.1} parent=11 // pred_check
          %p420 = pneg %p210
        $region34: #{tpu_custom_call.1} parent=11 // pred_check_branch
          %422 = sbr.rel (%p420) target = $region36
        $region35: #{tpu_custom_call.1} parent=11 // pred_region
          _
        $region36: #{tpu_custom_call.1} parent=11 // pred_fallthru
          _
        // Predicated region
        $region37: #{tpu_custom_call.1} parent=11 // pred_check
          %p423 = pneg %p231
        $region38: #{tpu_custom_call.1} parent=11 // pred_check_branch
          %425 = sbr.rel (%p423) target = $region40
        $region39: #{tpu_custom_call.1} parent=11 // pred_region
          _
        $region40: #{tpu_custom_call.1} parent=11 // pred_fallthru
          _
        // Predicated region
        $region41: #{tpu_custom_call.1} parent=11 // pred_check
          %p426 = pneg %p252
        $region42: #{tpu_custom_call.1} parent=11 // pred_check_branch
          %428 = sbr.rel (%p426) target = $region44
        $region43: #{tpu_custom_call.1} parent=11 // pred_region
          %430 = vsyncadd [#allocation7], 0
          %s431 = sshll.u32 %s9, 4
          %s432 = int_to_ptr.hbm [resolvable:$true] %s431
          %s433 = sshll.u32 [#allocation9], 4
          %s434 = int_to_ptr.vmem [resolvable:$true] %s433
          %439 = dma.hbm_to_vmem [thread:$0]  %s432, 512, %s434, [#allocation7], 128, 128, 8
        $region44: #{tpu_custom_call.1} parent=11 // pred_fallthru
          _
        // Predicated region
        $region45: #{tpu_custom_call.1} parent=11 // pred_check
          %p440 = pneg %p273
        $region46: #{tpu_custom_call.1} parent=11 // pred_check_branch
          %442 = sbr.rel (%p440) target = $region48
        $region47: #{tpu_custom_call.1} parent=11 // pred_region
          _
        $region48: #{tpu_custom_call.1} parent=11 // pred_fallthru
          _
        // Predicated region
        $region49: #{tpu_custom_call.1} parent=11 // pred_check
          %p443 = pneg %p294
        $region50: #{tpu_custom_call.1} parent=11 // pred_check_branch
          %445 = sbr.rel (%p443) target = $region52
        $region51: #{tpu_custom_call.1} parent=11 // pred_region
          %447 = vsyncadd [#allocation11], 0
          %s448 = sshll.u32 %s11, 4
          %s449 = int_to_ptr.hbm [resolvable:$true] %s448
          %s450 = sshll.u32 [#allocation10], 4
          %s451 = int_to_ptr.vmem [resolvable:$true] %s450
          %456 = dma.hbm_to_vmem [thread:$0]  %s449, 512, %s451, [#allocation11], 128, 128, 8
        $region52: #{tpu_custom_call.1} parent=11 // pred_fallthru
          _
        // Predicated region
        $region53: #{tpu_custom_call.1} parent=11 // pred_check
          %p457 = pneg %p315
        $region54: #{tpu_custom_call.1} parent=11 // pred_check_branch
          %459 = sbr.rel (%p457) target = $region56
        $region55: #{tpu_custom_call.1} parent=11 // pred_region
          _
        $region56: #{tpu_custom_call.1} parent=11 // pred_fallthru
          _
        // Predicated region
        $region57: #{tpu_custom_call.1} parent=11 // pred_check
          %p460 = pneg %p336
        $region58: #{tpu_custom_call.1} parent=11 // pred_check_branch
          %462 = sbr.rel (%p460) target = $region60
        $region59: #{tpu_custom_call.1} parent=11 // pred_region
          _
        $region60: #{tpu_custom_call.1} parent=11 // pred_fallthru
          _
        // Predicated region
        $region61: #{tpu_custom_call.1} parent=11 // pred_check
          %p463 = pneg %p357
        $region62: #{tpu_custom_call.1} parent=11 // pred_check_branch
          %465 = sbr.rel (%p463) target = $region64
        $region63: #{tpu_custom_call.1} parent=11 // pred_region
          _
        $region64: #{tpu_custom_call.1} parent=11 // pred_fallthru
          _
      $region12: #{tpu_custom_call.1} parent=5 // pred_fallthru
        _
      %p466 = scmp.lt.s32.totalorder %s32, 2
      // Predicated region
      $region65: #{tpu_custom_call.1} parent=5 // pred_check
        %p467 = pneg %p466
      $region66: #{tpu_custom_call.1} parent=5 // pred_check_branch
        %469 = sbr.rel (%p467) target = $region68
      $region67: #{tpu_custom_call.1} parent=5 // pred_region
        // Predicated region
        $region69: #{tpu_custom_call.1} parent=67 // pred_check
          %p470 = pneg %p52
        $region70: #{tpu_custom_call.1} parent=67 // pred_check_branch
          %472 = sbr.rel (%p470) target = $region72
        $region71: #{tpu_custom_call.1} parent=67 // pred_region
          %s473 = sand.u32 %s42, 1
          %s474 = scalar_lea.sflag [#allocation3], %s473
          %s475 = sand.u32 %s42, 1
          %s476 = smul.addr %s475, 8
          %s477 = scalar_lea.vmem [#allocation2], %s476
          %479 = vsyncadd %s474, 0
          %s480 = smul.addr %s32, 8
          %s481 = scalar_lea.hbm %s0, %s480
          %s483 = sshll.u32 %s481, 4
          %s484 = int_to_ptr.hbm [resolvable:$true] %s483
          %s485 = sshll.u32 %s477, 4
          %s486 = int_to_ptr.vmem [resolvable:$true] %s485
          %488 = dma.hbm_to_vmem [thread:$0]  %s484, 128, %s486, %s474
        $region72: #{tpu_custom_call.1} parent=67 // pred_fallthru
          _
        // Predicated region
        $region73: #{tpu_custom_call.1} parent=67 // pred_check
          %p489 = pneg %p78
        $region74: #{tpu_custom_call.1} parent=67 // pred_check_branch
          %491 = sbr.rel (%p489) target = $region76
        $region75: #{tpu_custom_call.1} parent=67 // pred_region
          %s492 = sand.u32 %s32, 1
          %s493 = scalar_lea.sflag [#allocation7], %s492
          %s494 = sand.u32 %s68, 1
          %s495 = smul.addr %s494, 8
          %s496 = scalar_lea.vmem [#allocation6], %s495
          %498 = vsyncadd %s493, 0
          %s499 = smul.addr %s32, 8
          %s500 = scalar_lea.hbm %s1, %s499
          %s502 = sshll.u32 %s500, 4
          %s503 = int_to_ptr.hbm [resolvable:$true] %s502
          %s504 = sshll.u32 %s496, 4
          %s505 = int_to_ptr.vmem [resolvable:$true] %s504
          %507 = dma.hbm_to_vmem [thread:$0]  %s503, 128, %s505, %s493
        $region76: #{tpu_custom_call.1} parent=67 // pred_fallthru
          _
      $region68: #{tpu_custom_call.1} parent=5 // pred_fallthru
        _
      %p508 = scmp.le.s32.totalorder 1, %s32
      %p509 = scmp.lt.s32.totalorder %s32, 3
      %p510 = pnand %p508, %p509
      %p511 = pneg %p510
      // Predicated region
      $region77: #{tpu_custom_call.1} parent=5 // pred_check
        _
      $region78: #{tpu_custom_call.1} parent=5 // pred_check_branch
        %513 = sbr.rel (%p510) target = $region80
      $region79: #{tpu_custom_call.1} parent=5 // pred_region
        %s514 = ssub.s32 %s32, 1
        %s515 = sand.u32 %s45, 1
        %s516 = scalar_lea.sflag [#allocation3], %s515
        %s517 = sand.u32 %s45, 1
        %s518 = smul.addr %s517, 8
        %s519 = scalar_lea.vmem [#allocation2], %s518
        // Predicated region
        $region81: #{tpu_custom_call.1} parent=79 // pred_check
          %p520 = pneg %p58
        $region82: #{tpu_custom_call.1} parent=79 // pred_check_branch
          %522 = sbr.rel (%p520) target = $region84
        $region83: #{tpu_custom_call.1} parent=79 // pred_region
          %524 = dma.done %s516, 128
        $region84: #{tpu_custom_call.1} parent=79 // pred_fallthru
          _
        %s525 = sand.u32 %s37, 1
        %s526 = scalar_lea.sflag [#allocation7], %s525
        %s527 = sand.u32 %s71, 1
        %s528 = smul.addr %s527, 8
        %s529 = scalar_lea.vmem [#allocation6], %s528
        // Predicated region
        $region85: #{tpu_custom_call.1} parent=79 // pred_check
          %p530 = pneg %p84
        $region86: #{tpu_custom_call.1} parent=79 // pred_check_branch
          %532 = sbr.rel (%p530) target = $region88
        $region87: #{tpu_custom_call.1} parent=79 // pred_region
          %534 = dma.done %s526, 128
        $region88: #{tpu_custom_call.1} parent=79 // pred_fallthru
          _
        // Predicated region
        $region89: #{tpu_custom_call.1} parent=79 // pred_check
          %p535 = pneg %p105
        $region90: #{tpu_custom_call.1} parent=79 // pred_check_branch
          %537 = sbr.rel (%p535) target = $region92
        $region91: #{tpu_custom_call.1} parent=79 // pred_region
          %539 = dma.done [#allocation5], 16
        $region92: #{tpu_custom_call.1} parent=79 // pred_fallthru
          _
        // Predicated region
        $region93: #{tpu_custom_call.1} parent=79 // pred_check
          %p540 = pneg %p252
        $region94: #{tpu_custom_call.1} parent=79 // pred_check_branch
          %542 = sbr.rel (%p540) target = $region96
        $region95: #{tpu_custom_call.1} parent=79 // pred_region
          %544 = dma.done [#allocation7], 512
        $region96: #{tpu_custom_call.1} parent=79 // pred_fallthru
          _
        // Predicated region
        $region97: #{tpu_custom_call.1} parent=79 // pred_check
          %p545 = pneg %p294
        $region98: #{tpu_custom_call.1} parent=79 // pred_check_branch
          %547 = sbr.rel (%p545) target = $region100
        $region99: #{tpu_custom_call.1} parent=79 // pred_region
          %549 = dma.done [#allocation11], 512
        $region100: #{tpu_custom_call.1} parent=79 // pred_fallthru
          _
        %550 = sfence
        %s551 = sand.u32 %s45, 1
        %s552 = scalar_lea.sflag [#allocation3], %s551
        %s553 = sand.u32 %s45, 1
        %s554 = smul.addr %s553, 8
        %s555 = scalar_lea.vmem [#allocation2], %s554
        %p556 = pneg %p58
        %p557 = pneg %p55
        %s558 = sand.u32 %s37, 1
        %s559 = scalar_lea.sflag [#allocation7], %s558
        %s560 = sand.u32 %s71, 1
        %s561 = smul.addr %s560, 8
        %s562 = scalar_lea.vmem [#allocation6], %s561
        %p563 = pneg %p84
        %p564 = pneg %p81
        %p565 = pneg %p105
        %p566 = pneg %p102
        %p567 = pneg %p126
        %p568 = pneg %p123
        %p569 = pneg %p147
        %p570 = pneg %p144
        %p571 = pneg %p168
        %p572 = pneg %p165
        %p573 = pneg %p189
        %p574 = pneg %p186
        %p575 = pneg %p210
        %p576 = pneg %p207
        %p577 = pneg %p231
        %p578 = pneg %p228
        %p579 = pneg %p252
        %p580 = pneg %p249
        %p581 = pneg %p273
        %p582 = pneg %p270
        %p583 = pneg %p294
        %p584 = pneg %p291
        %p585 = pneg %p315
        %p586 = pneg %p312
        %p587 = pneg %p336
        %p588 = pneg %p333
        %p589 = pneg %p357
        %p590 = pneg %p354
        %p591 = pneg %p383
        %p592 = pneg %p380
        %s593 = sand.u32 %s370, 1
        %s594 = scalar_lea.sflag [#allocation4], %s593
        %s595 = sand.u32 %s370, 1
        %s596 = smul.addr %s595, 8
        %s597 = scalar_lea.vmem [#allocation12], %s596
        %v598 = vld [vmem:[%s519] sm:$0xff]
        %v599 = vld [vmem:[%s529] sm:$0xff]
        %s600 = sld [smem:[#allocation8]]
        %s601 = sld [smem:[#allocation8 + $0x1]]
        %s602 = sld [smem:[#allocation8 + $0x2]]
        %s603 = sld [smem:[#allocation8 + $0x3]]
        %vm604 = vcmask 261120
        %v605 = vsel %vm604, %v598, 0.0
        %606 = vadd.xlane.f32.xlu0 %v605
        %v607 = vpop.xlane.xlu0 %606
        %v608 = vrcp.pop 32.0
        %v609 = vmul.f32 32.0, %v608
        %v610 = vsub.f32 1.0, %v609
        %v611 = vmul.f32 %v608, %v610
        %v612 = vadd.f32 %v608, %v611
        %vm613 = vweird.f32 %v608
        %v614 = vsel %vm613, %v608, %v612
        %v615 = vmul.f32 %v607, %v614
        %v616 = vsub.f32 %v598, %v615
        %v617 = vmul.f32 %v616, %v616
        %v618 = vsel %vm604, %v617, 0.0
        %619 = vadd.xlane.f32.xlu0 %v618
        %v620 = vpop.xlane.xlu0 %619
        %v621 = vmul.f32 %v620, 0.032258064
        %v622 = vrsqrt.pop %v621
        %v623 = vmul.f32 %v622, %v621
        %v624 = vmul.f32 %v623, %v622
        %v625 = vmul.f32 0.5, %v624
        %v626 = vsub.f32 1.5, %v625
        %v627 = vmul.f32 %v622, %v626
        %v628 = vmul.f32 %v621, %v627
        %vm629 = vcmp.eq.f32.partialorder %v621, inf
        %v630 = vsel %vm629, %v621, %v628
        %vm631 = vcmp.eq.f32.partialorder %v621, 0.0
        %v632 = vand.u32 %v621, 2147483648
        %v633 = vsel %vm631, %v632, %v630
        %v634 = vadd.f32 %v633, 1e-06
        %v635 = vrcp.pop %v634
        %v636 = vmul.f32 %v634, %v635
        %v637 = vsub.f32 1.0, %v636
        %v638 = vmul.f32 %v635, %v637
        %v639 = vadd.f32 %v635, %v638
        %vm640 = vweird.f32 %v634
        %vm641 = vweird.f32 %v635
        %vm642 = vmor %vm640, %vm641
        %v643 = vsel %vm642, %v635, %v639
        %v644 = vand.u32 2147483647, %v634
        %vm645 = vcmp.eq.f32.partialorder %v644, 8.507059e+37
        %v646 = vand.u32 %v634, 2147483648
        %v647 = vor.u32 1.1754944e-38, %v646
        %v648 = vsel %vm645, %v647, %v643
        %v649 = vmul.f32 %v616, %v648
        %v650 = vstv %s600
        %v651 = vmul.f32 %v649, %v650
        %v652 = vstv %s601
        %v653 = vadd.f32 %v651, %v652
        %v654 = vld [vmem:[%s3] sm:$0xff]
        %v655 = vld [vmem:[%s3 + $0x8] sm:$0xff]
        %v656 = vld [vmem:[%s3 + $0x10] sm:$0xff]
        %v657 = vld [vmem:[%s3 + $0x18] sm:$0xff]
        %v658 = vld [vmem:[%s4] sm:$0x1]
        %v660 = vperm.slane %v658, 0
        %v663 = vsel %vm604, %v653, 0
        %665 = vmatpush.msra.mxu0 0.0
        %666 = vmatpush.msra.mxu0 0.0
        %667 = vmatpush.msra.mxu0 0.0
        %668 = vmatpush.msra.mxu0 0.0
        %669 = vmatpush.msra.mxu0 0.0
        %670 = vmatpush.msra.mxu0 0.0
        %671 = vmatpush.msra.mxu0 0.0
        %672 = vmatpush.msra.mxu0 0.0
        %673 = vmatpush.msra.mxu0 0.0
        %674 = vmatpush.msra.mxu0 0.0
        %675 = vmatpush.msra.mxu0 0.0
        %676 = vmatpush.msra.mxu0 0.0
        %677 = vmatpush.msra.mxu0 %v657
        %678 = vmatpush.msra.mxu0 %v656
        %679 = vmatpush.msra.mxu0 %v655
        %680 = vmatpush.msra.mxu0 %v654
        %681 = vmatmul.f32.gmra.mxu0 %v663
        %v682 = vpop.f32.mrf.mxu0
        %v683 = vadd.f32 %v660, %v682
        %684 = vdwg.mxu0
        %v685 = vld [vmem:[%s5] sm:$0xff]
        %v686 = vld [vmem:[%s5 + $0x8] sm:$0xff]
        %v687 = vld [vmem:[%s5 + $0x10] sm:$0xff]
        %v688 = vld [vmem:[%s5 + $0x18] sm:$0xff]
        %v689 = vld [vmem:[%s6] sm:$0x1]
        %v691 = vperm.slane %v689, 0
        %693 = vmatpush.msra.mxu0 0.0
        %694 = vmatpush.msra.mxu0 0.0
        %695 = vmatpush.msra.mxu0 0.0
        %696 = vmatpush.msra.mxu0 0.0
        %697 = vmatpush.msra.mxu0 0.0
        %698 = vmatpush.msra.mxu0 0.0
        %699 = vmatpush.msra.mxu0 0.0
        %700 = vmatpush.msra.mxu0 0.0
        %701 = vmatpush.msra.mxu0 0.0
        %702 = vmatpush.msra.mxu0 0.0
        %703 = vmatpush.msra.mxu0 0.0
        %704 = vmatpush.msra.mxu0 0.0
        %705 = vmatpush.msra.mxu0 %v688
        %706 = vmatpush.msra.mxu0 %v687
        %707 = vmatpush.msra.mxu0 %v686
        %708 = vmatpush.msra.mxu0 %v685
        %709 = vmatmul.f32.gmra.mxu0 %v663
        %v710 = vpop.f32.mrf.mxu0
        %v711 = vadd.f32 %v691, %v710
        %712 = vdwg.mxu0
        %v713 = vld [vmem:[%s7] sm:$0xff]
        %v714 = vld [vmem:[%s7 + $0x8] sm:$0xff]
        %v715 = vld [vmem:[%s7 + $0x10] sm:$0xff]
        %v716 = vld [vmem:[%s7 + $0x18] sm:$0xff]
        %v717 = vld [vmem:[%s8] sm:$0x1]
        %v719 = vperm.slane %v717, 0
        %721 = vmatpush.msra.mxu0 0.0
        %722 = vmatpush.msra.mxu0 0.0
        %723 = vmatpush.msra.mxu0 0.0
        %724 = vmatpush.msra.mxu0 0.0
        %725 = vmatpush.msra.mxu0 0.0
        %726 = vmatpush.msra.mxu0 0.0
        %727 = vmatpush.msra.mxu0 0.0
        %728 = vmatpush.msra.mxu0 0.0
        %729 = vmatpush.msra.mxu0 0.0
        %730 = vmatpush.msra.mxu0 0.0
        %731 = vmatpush.msra.mxu0 0.0
        %732 = vmatpush.msra.mxu0 0.0
        %733 = vmatpush.msra.mxu0 %v716
        %734 = vmatpush.msra.mxu0 %v715
        %735 = vmatpush.msra.mxu0 %v714
        %736 = vmatpush.msra.mxu0 %v713
        %737 = vmatmul.f32.gmra.mxu0 %v663
        %v738 = vpop.f32.mrf.mxu0
        %v739 = vadd.f32 %v719, %v738
        %740 = vdwg.mxu0
        %vm741 = vcmask 64512
        %v743 = vsel %vm741, %v683, 0
        %v746 = vsel %vm741, %v711, 0
        %748 = vmatpush.xpose.msra.mxu0 0.0
        %749 = vmatpush.xpose.msra.mxu0 0.0
        %750 = vmatpush.xpose.msra.mxu0 0.0
        %751 = vmatpush.xpose.msra.mxu0 0.0
        %752 = vmatpush.xpose.msra.mxu0 0.0
        %753 = vmatpush.xpose.msra.mxu0 0.0
        %754 = vmatpush.xpose.msra.mxu0 0.0
        %755 = vmatpush.xpose.msra.mxu0 0.0
        %756 = vmatpush.xpose.msra.mxu0 0.0
        %757 = vmatpush.xpose.msra.mxu0 0.0
        %758 = vmatpush.xpose.msra.mxu0 0.0
        %759 = vmatpush.xpose.msra.mxu0 0.0
        %760 = vmatpush.xpose.msra.mxu0 0.0
        %761 = vmatpush.xpose.msra.mxu0 0.0
        %762 = vmatpush.xpose.msra.mxu0 0.0
        %763 = vmatpush.xpose.msra.mxu0 %v746
        %764 = vmatmul.f32.gmra.mxu0 %v743
        %v765 = vpop.f32.mrf.mxu0
        %v766 = vadd.f32 0.0, %v765
        %767 = vdwg.mxu0
        %v768 = vmul.f32 %v766, 0.35355338
        %vm769 = vcmp.eq.f32.partialorder %v599, 0.0
        %v770 = vsel %vm769, -1e+09, %v768
        %v771 = vsel %vm741, %v770, -inf
        %772 = vmax.xlane.f32.xlu0 %v771
        %v773 = vpop.xlane.xlu0 %772
        %v774 = vsub.f32 %v770, %v773
        %v775 = vmul.f32 %v774, 1.442695
        %v776 = vpow.pop %v775
        %v777 = vsel %vm741, %v776, 0.0
        %778 = vadd.xlane.f32.xlu0 %v777
        %v779 = vpop.xlane.xlu0 %778
        %v780 = vrcp.pop %v779
        %v781 = vmul.f32 %v779, %v780
        %v782 = vsub.f32 1.0, %v781
        %v783 = vmul.f32 %v780, %v782
        %v784 = vadd.f32 %v780, %v783
        %vm785 = vweird.f32 %v779
        %vm786 = vweird.f32 %v780
        %vm787 = vmor %vm785, %vm786
        %v788 = vsel %vm787, %v780, %v784
        %v789 = vand.u32 2147483647, %v779
        %vm790 = vcmp.eq.f32.partialorder %v789, 8.507059e+37
        %v791 = vand.u32 %v779, 2147483648
        %v792 = vor.u32 1.1754944e-38, %v791
        %v793 = vsel %vm790, %v792, %v788
        %v794 = vmul.f32 %v776, %v793
        %v796 = vsel %vm741, %v794, 0
        %798 = vmatpush.msra.mxu0 0.0
        %799 = vmatpush.msra.mxu0 0.0
        %800 = vmatpush.msra.mxu0 0.0
        %801 = vmatpush.msra.mxu0 0.0
        %802 = vmatpush.msra.mxu0 0.0
        %803 = vmatpush.msra.mxu0 0.0
        %804 = vmatpush.msra.mxu0 0.0
        %805 = vmatpush.msra.mxu0 0.0
        %806 = vmatpush.msra.mxu0 0.0
        %807 = vmatpush.msra.mxu0 0.0
        %808 = vmatpush.msra.mxu0 0.0
        %809 = vmatpush.msra.mxu0 0.0
        %810 = vmatpush.msra.mxu0 0.0
        %811 = vmatpush.msra.mxu0 0.0
        %812 = vmatpush.msra.mxu0 0.0
        %813 = vmatpush.msra.mxu0 %v739
        %814 = vmatmul.f32.gmra.mxu0 %v796
        %v815 = vpop.f32.mrf.mxu0
        %v816 = vadd.f32 0.0, %v815
        %817 = vdwg.mxu0
        %818 = vrot.lane.b32.xlu0 %v683, 120
        %v819 = vpop.permute.xlu0 %818
        %820 = vrot.lane.b32.xlu0 %v711, 120
        %v821 = vpop.permute.xlu0 %820
        %v822 = vsel %vm741, %v819, 0
        %v824 = vsel %vm741, %v821, 0
        %826 = vmatpush.xpose.msra.mxu0 0.0
        %827 = vmatpush.xpose.msra.mxu0 0.0
        %828 = vmatpush.xpose.msra.mxu0 0.0
        %829 = vmatpush.xpose.msra.mxu0 0.0
        %830 = vmatpush.xpose.msra.mxu0 0.0
        %831 = vmatpush.xpose.msra.mxu0 0.0
        %832 = vmatpush.xpose.msra.mxu0 0.0
        %833 = vmatpush.xpose.msra.mxu0 0.0
        %834 = vmatpush.xpose.msra.mxu0 0.0
        %835 = vmatpush.xpose.msra.mxu0 0.0
        %836 = vmatpush.xpose.msra.mxu0 0.0
        %837 = vmatpush.xpose.msra.mxu0 0.0
        %838 = vmatpush.xpose.msra.mxu0 0.0
        %839 = vmatpush.xpose.msra.mxu0 0.0
        %840 = vmatpush.xpose.msra.mxu0 0.0
        %841 = vmatpush.xpose.msra.mxu0 %v824
        %842 = vmatmul.f32.gmra.mxu0 %v822
        %v843 = vpop.f32.mrf.mxu0
        %v844 = vadd.f32 0.0, %v843
        %845 = vdwg.mxu0
        %v846 = vmul.f32 %v844, 0.35355338
        %v847 = vsel %vm769, -1e+09, %v846
        %v848 = vsel %vm741, %v847, -inf
        %849 = vmax.xlane.f32.xlu0 %v848
        %v850 = vpop.xlane.xlu0 %849
        %v851 = vsub.f32 %v847, %v850
        %v852 = vmul.f32 %v851, 1.442695
        %v853 = vpow.pop %v852
        %v854 = vsel %vm741, %v853, 0.0
        %855 = vadd.xlane.f32.xlu0 %v854
        %v856 = vpop.xlane.xlu0 %855
        %v857 = vrcp.pop %v856
        %v858 = vmul.f32 %v856, %v857
        %v859 = vsub.f32 1.0, %v858
        %v860 = vmul.f32 %v857, %v859
        %v861 = vadd.f32 %v857, %v860
        %vm862 = vweird.f32 %v856
        %vm863 = vweird.f32 %v857
        %vm864 = vmor %vm862, %vm863
        %v865 = vsel %vm864, %v857, %v861
        %v866 = vand.u32 2147483647, %v856
        %vm867 = vcmp.eq.f32.partialorder %v866, 8.507059e+37
        %v868 = vand.u32 %v856, 2147483648
        %v869 = vor.u32 1.1754944e-38, %v868
        %v870 = vsel %vm867, %v869, %v865
        %v871 = vmul.f32 %v853, %v870
        %873 = vrot.lane.b32.xlu0 %v739, 120
        %v874 = vpop.permute.xlu0 %873
        %v877 = vsel %vm741, %v871, 0
        %879 = vmatpush.msra.mxu0 0.0
        %880 = vmatpush.msra.mxu0 0.0
        %881 = vmatpush.msra.mxu0 0.0
        %882 = vmatpush.msra.mxu0 0.0
        %883 = vmatpush.msra.mxu0 0.0
        %884 = vmatpush.msra.mxu0 0.0
        %885 = vmatpush.msra.mxu0 0.0
        %886 = vmatpush.msra.mxu0 0.0
        %887 = vmatpush.msra.mxu0 0.0
        %888 = vmatpush.msra.mxu0 0.0
        %889 = vmatpush.msra.mxu0 0.0
        %890 = vmatpush.msra.mxu0 0.0
        %891 = vmatpush.msra.mxu0 0.0
        %892 = vmatpush.msra.mxu0 0.0
        %893 = vmatpush.msra.mxu0 0.0
        %894 = vmatpush.msra.mxu0 %v874
        %895 = vmatmul.f32.gmra.mxu0 %v877
        %v896 = vpop.f32.mrf.mxu0
        %v897 = vadd.f32 0.0, %v896
        %898 = vdwg.mxu0
        %899 = vrot.lane.b32.xlu0 %v683, 112
        %v900 = vpop.permute.xlu0 %899
        %901 = vrot.lane.b32.xlu0 %v711, 112
        %v902 = vpop.permute.xlu0 %901
        %v903 = vsel %vm741, %v900, 0
        %v905 = vsel %vm741, %v902, 0
        %907 = vmatpush.xpose.msra.mxu0 0.0
        %908 = vmatpush.xpose.msra.mxu0 0.0
        %909 = vmatpush.xpose.msra.mxu0 0.0
        %910 = vmatpush.xpose.msra.mxu0 0.0
        %911 = vmatpush.xpose.msra.mxu0 0.0
        %912 = vmatpush.xpose.msra.mxu0 0.0
        %913 = vmatpush.xpose.msra.mxu0 0.0
        %914 = vmatpush.xpose.msra.mxu0 0.0
        %915 = vmatpush.xpose.msra.mxu0 0.0
        %916 = vmatpush.xpose.msra.mxu0 0.0
        %917 = vmatpush.xpose.msra.mxu0 0.0
        %918 = vmatpush.xpose.msra.mxu0 0.0
        %919 = vmatpush.xpose.msra.mxu0 0.0
        %920 = vmatpush.xpose.msra.mxu0 0.0
        %921 = vmatpush.xpose.msra.mxu0 0.0
        %922 = vmatpush.xpose.msra.mxu0 %v905
        %923 = vmatmul.f32.gmra.mxu0 %v903
        %v924 = vpop.f32.mrf.mxu0
        %v925 = vadd.f32 0.0, %v924
        %926 = vdwg.mxu0
        %v927 = vmul.f32 %v925, 0.35355338
        %v928 = vsel %vm769, -1e+09, %v927
        %v929 = vsel %vm741, %v928, -inf
        %930 = vmax.xlane.f32.xlu0 %v929
        %v931 = vpop.xlane.xlu0 %930
        %v932 = vsub.f32 %v928, %v931
        %v933 = vmul.f32 %v932, 1.442695
        %v934 = vpow.pop %v933
        %v935 = vsel %vm741, %v934, 0.0
        %936 = vadd.xlane.f32.xlu0 %v935
        %v937 = vpop.xlane.xlu0 %936
        %v938 = vrcp.pop %v937
        %v939 = vmul.f32 %v937, %v938
        %v940 = vsub.f32 1.0, %v939
        %v941 = vmul.f32 %v938, %v940
        %v942 = vadd.f32 %v938, %v941
        %vm943 = vweird.f32 %v937
        %vm944 = vweird.f32 %v938
        %vm945 = vmor %vm943, %vm944
        %v946 = vsel %vm945, %v938, %v942
        %v947 = vand.u32 2147483647, %v937
        %vm948 = vcmp.eq.f32.partialorder %v947, 8.507059e+37
        %v949 = vand.u32 %v937, 2147483648
        %v950 = vor.u32 1.1754944e-38, %v949
        %v951 = vsel %vm948, %v950, %v946
        %v952 = vmul.f32 %v934, %v951
        %953 = vrot.lane.b32.xlu0 %v739, 112
        %v954 = vpop.permute.xlu0 %953
        %v957 = vsel %vm741, %v952, 0
        %959 = vmatpush.msra.mxu0 0.0
        %960 = vmatpush.msra.mxu0 0.0
        %961 = vmatpush.msra.mxu0 0.0
        %962 = vmatpush.msra.mxu0 0.0
        %963 = vmatpush.msra.mxu0 0.0
        %964 = vmatpush.msra.mxu0 0.0
        %965 = vmatpush.msra.mxu0 0.0
        %966 = vmatpush.msra.mxu0 0.0
        %967 = vmatpush.msra.mxu0 0.0
        %968 = vmatpush.msra.mxu0 0.0
        %969 = vmatpush.msra.mxu0 0.0
        %970 = vmatpush.msra.mxu0 0.0
        %971 = vmatpush.msra.mxu0 0.0
        %972 = vmatpush.msra.mxu0 0.0
        %973 = vmatpush.msra.mxu0 0.0
        %974 = vmatpush.msra.mxu0 %v954
        %975 = vmatmul.f32.gmra.mxu0 %v957
        %v976 = vpop.f32.mrf.mxu0
        %v977 = vadd.f32 0.0, %v976
        %978 = vdwg.mxu0
        %979 = vrot.lane.b32.xlu0 %v683, 104
        %v980 = vpop.permute.xlu0 %979
        %981 = vrot.lane.b32.xlu0 %v711, 104
        %v982 = vpop.permute.xlu0 %981
        %v983 = vsel %vm741, %v980, 0
        %v985 = vsel %vm741, %v982, 0
        %987 = vmatpush.xpose.msra.mxu0 0.0
        %988 = vmatpush.xpose.msra.mxu0 0.0
        %989 = vmatpush.xpose.msra.mxu0 0.0
        %990 = vmatpush.xpose.msra.mxu0 0.0
        %991 = vmatpush.xpose.msra.mxu0 0.0
        %992 = vmatpush.xpose.msra.mxu0 0.0
        %993 = vmatpush.xpose.msra.mxu0 0.0
        %994 = vmatpush.xpose.msra.mxu0 0.0
        %995 = vmatpush.xpose.msra.mxu0 0.0
        %996 = vmatpush.xpose.msra.mxu0 0.0
        %997 = vmatpush.xpose.msra.mxu0 0.0
        %998 = vmatpush.xpose.msra.mxu0 0.0
        %999 = vmatpush.xpose.msra.mxu0 0.0
        %1000 = vmatpush.xpose.msra.mxu0 0.0
        %1001 = vmatpush.xpose.msra.mxu0 0.0
        %1002 = vmatpush.xpose.msra.mxu0 %v985
        %1003 = vmatmul.f32.gmra.mxu0 %v983
        %v1004 = vpop.f32.mrf.mxu0
        %v1005 = vadd.f32 0.0, %v1004
        %1006 = vdwg.mxu0
        %v1007 = vmul.f32 %v1005, 0.35355338
        %v1008 = vsel %vm769, -1e+09, %v1007
        %v1009 = vsel %vm741, %v1008, -inf
        %1010 = vmax.xlane.f32.xlu0 %v1009
        %v1011 = vpop.xlane.xlu0 %1010
        %v1012 = vsub.f32 %v1008, %v1011
        %v1013 = vmul.f32 %v1012, 1.442695
        %v1014 = vpow.pop %v1013
        %v1015 = vsel %vm741, %v1014, 0.0
        %1016 = vadd.xlane.f32.xlu0 %v1015
        %v1017 = vpop.xlane.xlu0 %1016
        %v1018 = vrcp.pop %v1017
        %v1019 = vmul.f32 %v1017, %v1018
        %v1020 = vsub.f32 1.0, %v1019
        %v1021 = vmul.f32 %v1018, %v1020
        %v1022 = vadd.f32 %v1018, %v1021
        %vm1023 = vweird.f32 %v1017
        %vm1024 = vweird.f32 %v1018
        %vm1025 = vmor %vm1023, %vm1024
        %v1026 = vsel %vm1025, %v1018, %v1022
        %v1027 = vand.u32 2147483647, %v1017
        %vm1028 = vcmp.eq.f32.partialorder %v1027, 8.507059e+37
        %v1029 = vand.u32 %v1017, 2147483648
        %v1030 = vor.u32 1.1754944e-38, %v1029
        %v1031 = vsel %vm1028, %v1030, %v1026
        %v1032 = vmul.f32 %v1014, %v1031
        %1033 = vrot.lane.b32.xlu0 %v739, 104
        %v1034 = vpop.permute.xlu0 %1033
        %v1037 = vsel %vm741, %v1032, 0
        %1039 = vmatpush.msra.mxu0 0.0
        %1040 = vmatpush.msra.mxu0 0.0
        %1041 = vmatpush.msra.mxu0 0.0
        %1042 = vmatpush.msra.mxu0 0.0
        %1043 = vmatpush.msra.mxu0 0.0
        %1044 = vmatpush.msra.mxu0 0.0
        %1045 = vmatpush.msra.mxu0 0.0
        %1046 = vmatpush.msra.mxu0 0.0
        %1047 = vmatpush.msra.mxu0 0.0
        %1048 = vmatpush.msra.mxu0 0.0
        %1049 = vmatpush.msra.mxu0 0.0
        %1050 = vmatpush.msra.mxu0 0.0
        %1051 = vmatpush.msra.mxu0 0.0
        %1052 = vmatpush.msra.mxu0 0.0
        %1053 = vmatpush.msra.mxu0 0.0
        %1054 = vmatpush.msra.mxu0 %v1034
        %1055 = vmatmul.f32.gmra.mxu0 %v1037
        %v1056 = vpop.f32.mrf.mxu0
        %v1057 = vadd.f32 0.0, %v1056
        %1058 = vdwg.mxu0
        %1060 = vrot.lane.b32.xlu0 %v897, 8
        %v1061 = vpop.permute.xlu0 %1060
        %1064 = vrot.lane.b32.xlu0 %v977, 16
        %v1065 = vpop.permute.xlu0 %1064
        %1068 = vrot.lane.b32.xlu0 %v1057, 24
        %v1069 = vpop.permute.xlu0 %1068
        %v1071 = vsel %vm741, %v816, %v1061
        %vm1072 = vcmask 130048
        %v1073 = vsel %vm1072, %v1071, %v1065
        %vm1074 = vcmask 195584
        %v1075 = vsel %vm1074, %v1073, %v1069
        %v1076 = vld [vmem:[#allocation9] sm:$0xff]
        %v1077 = vld [vmem:[#allocation9 + $0x8] sm:$0xff]
        %v1078 = vld [vmem:[#allocation9 + $0x10] sm:$0xff]
        %v1079 = vld [vmem:[#allocation9 + $0x18] sm:$0xff]
        %v1080 = vld [vmem:[%s10] sm:$0x1]
        %v1082 = vperm.slane %v1080, 0
        %v1085 = vsel %vm604, %v1075, 0
        %1087 = vmatpush.msra.mxu0 0.0
        %1088 = vmatpush.msra.mxu0 0.0
        %1089 = vmatpush.msra.mxu0 0.0
        %1090 = vmatpush.msra.mxu0 0.0
        %1091 = vmatpush.msra.mxu0 0.0
        %1092 = vmatpush.msra.mxu0 0.0
        %1093 = vmatpush.msra.mxu0 0.0
        %1094 = vmatpush.msra.mxu0 0.0
        %1095 = vmatpush.msra.mxu0 0.0
        %1096 = vmatpush.msra.mxu0 0.0
        %1097 = vmatpush.msra.mxu0 0.0
        %1098 = vmatpush.msra.mxu0 0.0
        %1099 = vmatpush.msra.mxu0 %v1079
        %1100 = vmatpush.msra.mxu0 %v1078
        %1101 = vmatpush.msra.mxu0 %v1077
        %1102 = vmatpush.msra.mxu0 %v1076
        %1103 = vmatmul.f32.gmra.mxu0 %v1085
        %v1104 = vpop.f32.mrf.mxu0
        %v1105 = vadd.f32 %v1082, %v1104
        %1106 = vdwg.mxu0
        %v1107 = vadd.f32 %v598, %v1105
        %v1108 = vsel %vm604, %v1107, 0.0
        %1109 = vadd.xlane.f32.xlu0 %v1108
        %v1110 = vpop.xlane.xlu0 %1109
        %v1111 = vmul.f32 %v1110, %v614
        %v1112 = vsub.f32 %v1107, %v1111
        %v1113 = vmul.f32 %v1112, %v1112
        %v1114 = vsel %vm604, %v1113, 0.0
        %1115 = vadd.xlane.f32.xlu0 %v1114
        %v1116 = vpop.xlane.xlu0 %1115
        %v1117 = vmul.f32 %v1116, 0.032258064
        %v1118 = vrsqrt.pop %v1117
        %v1119 = vmul.f32 %v1118, %v1117
        %v1120 = vmul.f32 %v1119, %v1118
        %v1121 = vmul.f32 0.5, %v1120
        %v1122 = vsub.f32 1.5, %v1121
        %v1123 = vmul.f32 %v1118, %v1122
        %v1124 = vmul.f32 %v1117, %v1123
        %vm1125 = vcmp.eq.f32.partialorder %v1117, inf
        %v1126 = vsel %vm1125, %v1117, %v1124
        %vm1127 = vcmp.eq.f32.partialorder %v1117, 0.0
        %v1128 = vand.u32 %v1117, 2147483648
        %v1129 = vsel %vm1127, %v1128, %v1126
        %v1130 = vadd.f32 %v1129, 1e-06
        %v1131 = vrcp.pop %v1130
        %v1132 = vmul.f32 %v1130, %v1131
        %v1133 = vsub.f32 1.0, %v1132
        %v1134 = vmul.f32 %v1131, %v1133
        %v1135 = vadd.f32 %v1131, %v1134
        %vm1136 = vweird.f32 %v1130
        %vm1137 = vweird.f32 %v1131
        %vm1138 = vmor %vm1136, %vm1137
        %v1139 = vsel %vm1138, %v1131, %v1135
        %v1140 = vand.u32 2147483647, %v1130
        %vm1141 = vcmp.eq.f32.partialorder %v1140, 8.507059e+37
        %v1142 = vand.u32 %v1130, 2147483648
        %v1143 = vor.u32 1.1754944e-38, %v1142
        %v1144 = vsel %vm1141, %v1143, %v1139
        %v1145 = vmul.f32 %v1112, %v1144
        %v1146 = vstv %s602
        %v1147 = vmul.f32 %v1145, %v1146
        %v1148 = vstv %s603
        %v1149 = vadd.f32 %v1147, %v1148
        %v1150 = vld [vmem:[#allocation10] sm:$0xff]
        %v1151 = vld [vmem:[#allocation10 + $0x8] sm:$0xff]
        %v1152 = vld [vmem:[#allocation10 + $0x10] sm:$0xff]
        %v1153 = vld [vmem:[#allocation10 + $0x18] sm:$0xff]
        %v1154 = vld [vmem:[%s12] sm:$0x1]
        %v1156 = vperm.slane %v1154, 0
        %v1159 = vsel %vm604, %v1149, 0
        %1161 = vmatpush.msra.mxu0 0.0
        %1162 = vmatpush.msra.mxu0 0.0
        %1163 = vmatpush.msra.mxu0 0.0
        %1164 = vmatpush.msra.mxu0 0.0
        %1165 = vmatpush.msra.mxu0 0.0
        %1166 = vmatpush.msra.mxu0 0.0
        %1167 = vmatpush.msra.mxu0 0.0
        %1168 = vmatpush.msra.mxu0 0.0
        %1169 = vmatpush.msra.mxu0 0.0
        %1170 = vmatpush.msra.mxu0 0.0
        %1171 = vmatpush.msra.mxu0 0.0
        %1172 = vmatpush.msra.mxu0 0.0
        %1173 = vmatpush.msra.mxu0 %v1153
        %1174 = vmatpush.msra.mxu0 %v1152
        %1175 = vmatpush.msra.mxu0 %v1151
        %1176 = vmatpush.msra.mxu0 %v1150
        %1177 = vmatmul.f32.gmra.mxu0 %v1159
        %v1178 = vpop.f32.mrf.mxu0
        %v1179 = vadd.f32 %v1156, %v1178
        %1180 = vdwg.mxu0
        %v1181 = vmax.f32 %v1179, 0.0
        %v1182 = vld [vmem:[%s13] sm:$0xff]
        %v1183 = vld [vmem:[%s13 + $0x8] sm:$0xff]
        %v1184 = vld [vmem:[%s13 + $0x10] sm:$0xff]
        %v1185 = vld [vmem:[%s13 + $0x18] sm:$0xff]
        %v1186 = vld [vmem:[%s13 + $0x20] sm:$0xff]
        %v1187 = vld [vmem:[%s13 + $0x28] sm:$0xff]
        %v1188 = vld [vmem:[%s13 + $0x30] sm:$0xff]
        %v1189 = vld [vmem:[%s13 + $0x38] sm:$0xff]
        %v1190 = vld [vmem:[%s14] sm:$0x1]
        %v1192 = vperm.slane %v1190, 0
        %vm1194 = vcmask 523264
        %v1196 = vsel %vm1194, %v1181, 0
        %1198 = vmatpush.msra.mxu0 0.0
        %1199 = vmatpush.msra.mxu0 0.0
        %1200 = vmatpush.msra.mxu0 0.0
        %1201 = vmatpush.msra.mxu0 0.0
        %1202 = vmatpush.msra.mxu0 0.0
        %1203 = vmatpush.msra.mxu0 0.0
        %1204 = vmatpush.msra.mxu0 0.0
        %1205 = vmatpush.msra.mxu0 0.0
        %1206 = vmatpush.msra.mxu0 %v1189
        %1207 = vmatpush.msra.mxu0 %v1188
        %1208 = vmatpush.msra.mxu0 %v1187
        %1209 = vmatpush.msra.mxu0 %v1186
        %1210 = vmatpush.msra.mxu0 %v1185
        %1211 = vmatpush.msra.mxu0 %v1184
        %1212 = vmatpush.msra.mxu0 %v1183
        %1213 = vmatpush.msra.mxu0 %v1182
        %1214 = vmatmul.f32.gmra.mxu0 %v1196
        %v1215 = vpop.f32.mrf.mxu0
        %v1216 = vadd.f32 %v1192, %v1215
        %1217 = vdwg.mxu0
        %v1218 = vadd.f32 %v1107, %v1216
        %1219 = vst.msk [vmem:[%s597] sm:$0xff] %vm604, %v1218
        %s1220 = sand.u32 %s370, 1
        %s1221 = scalar_lea.sflag [#allocation4], %s1220
        %s1222 = sand.u32 %s370, 1
        %s1223 = smul.addr %s1222, 8
        %s1224 = scalar_lea.vmem [#allocation12], %s1223
        // Predicated region
        $region101: #{tpu_custom_call.1} parent=79 // pred_check
          %p1225 = pneg %p380
        $region102: #{tpu_custom_call.1} parent=79 // pred_check_branch
          %1227 = sbr.rel (%p1225) target = $region104
        $region103: #{tpu_custom_call.1} parent=79 // pred_region
          %1229 = vsyncadd %s1221, 0
          %s1230 = smul.addr %s37, 8
          %s1231 = scalar_lea.hbm %s15, %s1230
          %s1233 = sshll.u32 %s1224, 4
          %s1234 = int_to_ptr.vmem [resolvable:$true] %s1233
          %s1235 = sshll.u32 %s1231, 4
          %s1236 = int_to_ptr.hbm [resolvable:$true] %s1235
          %1238 = dma.vmem_to_hbm [thread:$0]  %s1234, 128, %s1236, %s1221
        $region104: #{tpu_custom_call.1} parent=79 // pred_fallthru
          _
      $region80: #{tpu_custom_call.1} parent=5 // pred_fallthru
        _
      %p1239 = scmp.le.s32.totalorder 2, %s32
      // Predicated region
      $region105: #{tpu_custom_call.1} parent=5 // pred_check
        %p1240 = pneg %p1239
      $region106: #{tpu_custom_call.1} parent=5 // pred_check_branch
        %1242 = sbr.rel (%p1240) target = $region108
      $region107: #{tpu_custom_call.1} parent=5 // pred_region
        %s1243 = ssub.s32 %s32, 2
        // Predicated region
        $region109: #{tpu_custom_call.1} parent=107 // pred_check
          %p1244 = pneg %p386
        $region110: #{tpu_custom_call.1} parent=107 // pred_check_branch
          %1246 = sbr.rel (%p1244) target = $region112
        $region111: #{tpu_custom_call.1} parent=107 // pred_region
          %s1247 = sand.u32 %s371, 1
          %s1248 = scalar_lea.sflag [#allocation4], %s1247
          %s1249 = sand.u32 %s371, 1
          %s1250 = smul.addr %s1249, 8
          %s1251 = scalar_lea.vmem [#allocation12], %s1250
          %1253 = dma.done %s1248, 128
        $region112: #{tpu_custom_call.1} parent=107 // pred_fallthru
          _
      $region108: #{tpu_custom_call.1} parent=5 // pred_fallthru
        _
    $region6: #{tpu_custom_call.1} parent=1 // loop_footer
      %s36 = sadd.s32 1, %s32
    $region7: #{tpu_custom_call.1} parent=1 // loop_footer_branch
      %31 = sbr.rel target = $region3
    $region8: #{tpu_custom_call.1} parent=1 // loop_exit
      _
    %1254 = vsyncpa [#allocation3], 1
    %s1255 = scalar_lea.sflag [#allocation3], 1
    %1256 = vsyncpa %s1255, 1
    %1257 = vsyncpa [#allocation7], 1
    %s1258 = scalar_lea.sflag [#allocation7], 1
    %1259 = vsyncpa %s1258, 1
    %1260 = vsyncpa [#allocation11], 1
    %1261 = vsyncpa [#allocation4], 1
    %s1262 = scalar_lea.sflag [#allocation4], 1
    %1263 = vsyncpa %s1262, 1
    %1264 = vsyncpa [#allocation5], 1
    %s1265 = scalar_lea.sflag [#allocation5], 1
    %1266 = vsyncpa %s1265, 1

</llo_original>
